<compile_context>
chip_gen: v7x
topology: tpu7x:2x2x1
jax: 0.10.0
libtpu: 0.0.40
codegen_flags: <defaults>
</compile_context>

<pallas_src>
import jax
import jax.numpy as jnp
import numpy as np
from jax.experimental import pallas as pl
from jax.experimental.pallas import tpu as pltpu

BN_EPS = 1e-5


def _batch_rnn_kernel(x_ref, wih_t_ref, whh_t_ref, scale_ref, shift_ref,
                      y_ref, h_scr):
    """One grid step processes (block_n batch rows) x (block_t timesteps).

    x_ref:      (Tb, N, I)      time-major input block
    wih_t_ref:  (I, 3H)         W_ih^T (gate order [r, z, n], PyTorch convention)
    whh_t_ref:  (H, 3H)         W_hh^T
    scale_ref:  (1, Tb*H)       folded BN scale, tiled over the time block
    shift_ref:  (1, Tb*H)       folded BN shift, tiled over the time block
    y_ref:      (N, Tb*H)       output block (time flattened into lanes -> dense store)
    h_scr:      (N, H)          GRU hidden state carried across time blocks (f32)
    """
    tb = pl.program_id(1)
    t_blk, n, i_dim = x_ref.shape
    h_dim = whh_t_ref.shape[0]

    @pl.when(tb == 0)
    def _():
        h_scr[...] = jnp.zeros_like(h_scr)

    # --- Hoisted input projection: ONE MXU matmul for the whole time block ---
    # (Tb, N, I) -> (Tb*N, I) @ (I, 3H) -> (Tb*N, 3H).  The reshape only collapses
    # major dims (lane dim unchanged), so per-step slices below are contiguous
    # sublane-group slices.
    x2 = x_ref[...].reshape(t_blk * n, i_dim)
    gx = jnp.dot(x2, wih_t_ref[...], preferred_element_type=jnp.float32)   # (Tb*N, 3H)

    whh_t = whh_t_ref[...]          # (H, 3H), resident for the whole block
    h = h_scr[...]                  # (N, H) f32 carry

    ys = []
    # Serial recurrence; t_blk is a compile-time block size, so this fully unrolls.
    # Only the small (N,H)@(H,3H) matmul sits on the serial chain.
    for t in range(t_blk):
        gx_t = gx[t * n:(t + 1) * n, :]                                    # (N, 3H)
        gh = jnp.dot(h, whh_t, preferred_element_type=jnp.float32)         # (N, 3H)
        r = jax.nn.sigmoid(gx_t[:, 0:h_dim] + gh[:, 0:h_dim])
        z = jax.nn.sigmoid(gx_t[:, h_dim:2 * h_dim] + gh[:, h_dim:2 * h_dim])
        g = jnp.tanh(gx_t[:, 2 * h_dim:3 * h_dim] + r * gh[:, 2 * h_dim:3 * h_dim])
        h = (1.0 - z) * g + z * h
        ys.append(h)
    h_scr[...] = h

    # Folded eval-mode BatchNorm applied ONCE to the whole block; eval Dropout = identity.
    hs = jnp.concatenate(ys, axis=-1)                                       # (N, Tb*H)
    y_ref[...] = (hs * scale_ref[...] + shift_ref[...]).astype(y_ref.dtype)


def batch_rnn_forward(x, w_ih, w_hh, gamma, beta, run_mean, run_var, *,
                      block_n=None, block_t=None):
    """x: (N, T, I).  w_ih: (3H, I), w_hh: (3H, H).  BN params: (H,).  Returns (N, T, H)."""
    N, T, I = x.shape
    H = w_hh.shape[1]

    # Time block (second-minor dim of the x block -> 8-aligned); whole sequence if small.
    if block_t is None:
        block_t = min(((T + 7) // 8) * 8, 128)
    block_t = max(8, (block_t // 8) * 8)
    T_pad = ((T + block_t - 1) // block_t) * block_t

    # Batch block (sublane width 8-aligned).  Padded rows stay exactly zero through the GRU
    # (sigmoid(0)/tanh(0) keep h == 0) and are sliced off at the end.
    if block_n is None:
        block_n = min(max(8, ((N + 7) // 8) * 8), 256)
    block_n = max(8, (block_n // 8) * 8)
    N_pad = ((N + block_n - 1) // block_n) * block_n

    num_n_blocks = N_pad // block_n
    num_t_blocks = T_pad // block_t

    # Time-major layout for the recurrence (one-time wrapper-side layout plumbing).
    x_tm = jnp.transpose(x, (1, 0, 2))                                      # (T, N, I)
    x_p = jnp.zeros((T_pad, N_pad, I), x.dtype).at[:T, :N, :].set(x_tm)

    # One-time tiny weight transposes (kept in HBM, re-used by every grid step).
    w_ih_t = jnp.transpose(w_ih, (1, 0))                                    # (I, 3H)
    w_hh_t = jnp.transpose(w_hh, (1, 0))                                    # (H, 3H)

    # Fold eval-mode BatchNorm1d into scale/shift and pre-tile over the time block so the
    # kernel applies it with one fused multiply-add over the whole (N, Tb*H) slab.
    inv_std = jax.lax.rsqrt(run_var + BN_EPS)
    scale = (gamma * inv_std).reshape(1, H)
    shift = (beta - run_mean * gamma * inv_std).reshape(1, H)
    scale_b = jnp.tile(scale, (1, block_t))                                 # (1, Tb*H)
    shift_b = jnp.tile(shift, (1, block_t))                                 # (1, Tb*H)

    full = lambda nb, tb: (0, 0)
    grid_spec = pltpu.PrefetchScalarGridSpec(
        num_scalar_prefetch=0,
        grid=(num_n_blocks, num_t_blocks),
        in_specs=[
            pl.BlockSpec((block_t, block_n, I), lambda nb, tb: (tb, nb, 0)),  # x block (time-major)
            pl.BlockSpec((I, 3 * H), full),                                   # W_ih^T
            pl.BlockSpec((H, 3 * H), full),                                   # W_hh^T
            pl.BlockSpec((1, block_t * H), full),                             # BN scale (tiled)
            pl.BlockSpec((1, block_t * H), full),                             # BN shift (tiled)
        ],
        out_specs=pl.BlockSpec((block_n, block_t * H), lambda nb, tb: (nb, tb)),
        scratch_shapes=[pltpu.VMEM((block_n, H), jnp.float32)],               # hidden-state carry
    )

    y_p = pl.pallas_call(
        _batch_rnn_kernel,
        out_shape=jax.ShapeDtypeStruct((N_pad, T_pad * H), jnp.float32),
        grid_spec=grid_spec,
        compiler_params=pltpu.CompilerParams(
            # batch blocks are independent (megacore-shardable); time blocks carry state.
            dimension_semantics=("parallel", "arbitrary")),
    )(x_p, w_ih_t, w_hh_t, scale_b, shift_b)

    return y_p.reshape(N_pad, T_pad, H)[:N, :T, :]


def batch_rnn_reference(x, w_ih, w_hh, gamma, beta, run_mean, run_var):
    """Pure-JAX reference matching PyTorch GRU(bias=False) + eval BatchNorm1d + eval Dropout."""
    N, T, I = x.shape
    H = w_hh.shape[1]

    def step(h, x_t):
        gx = x_t @ w_ih.T
        gh = h @ w_hh.T
        r = jax.nn.sigmoid(gx[:, :H] + gh[:, :H])
        z = jax.nn.sigmoid(gx[:, H:2 * H] + gh[:, H:2 * H])
        n = jnp.tanh(gx[:, 2 * H:] + r * gh[:, 2 * H:])
        h_new = (1.0 - z) * n + z * h
        return h_new, h_new

    h0 = jnp.zeros((N, H), jnp.float32)
    _, hs = jax.lax.scan(step, h0, jnp.transpose(x, (1, 0, 2)))   # (T, N, H)
    hs = jnp.transpose(hs, (1, 0, 2))                             # (N, T, H)
    y = (hs - run_mean) * jax.lax.rsqrt(run_var + BN_EPS) * gamma + beta
    return y


if __name__ == "__main__":
    # Small shapes implied by the module: batch=2, seq=8, input_size=16, hidden=32
    N, T, I, H = 2, 8, 16, 32

    key = jax.random.PRNGKey(0)
    k_x, k_wih, k_whh, k_g, k_b, k_m, k_v = jax.random.split(key, 7)

    bound = 1.0 / np.sqrt(H)   # PyTorch GRU default init range
    x = jax.random.normal(k_x, (N, T, I), dtype=jnp.float32)
    w_ih = jax.random.uniform(k_wih, (3 * H, I), minval=-bound, maxval=bound, dtype=jnp.float32)
    w_hh = jax.random.uniform(k_whh, (3 * H, H), minval=-bound, maxval=bound, dtype=jnp.float32)
    gamma = 1.0 + 0.1 * jax.random.normal(k_g, (H,), dtype=jnp.float32)
    beta = 0.1 * jax.random.normal(k_b, (H,), dtype=jnp.float32)
    run_mean = 0.1 * jax.random.normal(k_m, (H,), dtype=jnp.float32)
    run_var = 1.0 + 0.1 * jax.random.uniform(k_v, (H,), dtype=jnp.float32)

    y = batch_rnn_forward(x, w_ih, w_hh, gamma, beta, run_mean, run_var)
    y = jax.block_until_ready(y)

    y_ref = batch_rnn_reference(x, w_ih, w_hh, gamma, beta, run_mean, run_var)
    np.testing.assert_allclose(np.asarray(y), np.asarray(y_ref), rtol=2e-4, atol=2e-4)

    print("KERNEL_OK")
</pallas_src>

<mosaic_0001>
module attributes {stable_mosaic.version = 11 : i64} {
  func.func @_batch_rnn_kernel(%arg0: i32, %arg1: i32, %arg2: memref<8x8x16xf32, #tpu.memory_space<vmem>>, %arg3: memref<16x96xf32, #tpu.memory_space<vmem>>, %arg4: memref<32x96xf32, #tpu.memory_space<vmem>>, %arg5: memref<1x256xf32, #tpu.memory_space<vmem>>, %arg6: memref<1x256xf32, #tpu.memory_space<vmem>>, %arg7: memref<8x256xf32, #tpu.memory_space<vmem>>, %arg8: memref<8x32xf32, #tpu.memory_space<vmem>>) attributes {dimension_semantics = [#tpu.dimension_semantics<parallel>, #tpu.dimension_semantics<arbitrary>], iteration_bounds = array<i64: 1, 1>, scalar_prefetch = 0 : i64, scratch_operands = 1 : i64, tpu.core_type = #tpu.core_type<tc>, window_params = [{transform_indices = @transform_0, window_bounds = array<i64: 8, 8, 16>}, {pipeline_mode = #tpu.pipeline_mode<synchronous>, transform_indices = @transform_1, window_bounds = array<i64: 16, 96>}, {pipeline_mode = #tpu.pipeline_mode<synchronous>, transform_indices = @transform_2, window_bounds = array<i64: 32, 96>}, {pipeline_mode = #tpu.pipeline_mode<synchronous>, transform_indices = @transform_3, window_bounds = array<i64: 1, 256>}, {pipeline_mode = #tpu.pipeline_mode<synchronous>, transform_indices = @transform_4, window_bounds = array<i64: 1, 256>}, {transform_indices = @transform_5, window_bounds = array<i64: 8, 256>}]} {
    %c0_i32 = arith.constant 0 : i32
    %0 = arith.cmpi eq, %arg1, %c0_i32 : i32
    %1 = arith.extui %0 : i1 to i32
    %c0_i32_0 = arith.constant 0 : i32
    %2 = arith.cmpi ne, %1, %c0_i32_0 : i32
    scf.if %2 {
      %cst_49 = arith.constant 0.000000e+00 : f32
      %242 = vector.broadcast %cst_49 : f32 to vector<8x32xf32>
      %c0_50 = arith.constant 0 : index
      %c0_51 = arith.constant 0 : index
      %243 = vector.load %arg8[%c0_50, %c0_51] : memref<8x32xf32, #tpu.memory_space<vmem>>, vector<8x32xf32>
      tpu.vector_store %arg8[%c0_50, %c0_51], %242 {strides = array<i32>} : memref<8x32xf32, #tpu.memory_space<vmem>>, vector<8x32xf32>,
    } else {
    }
    %c0 = arith.constant 0 : index
    %c0_1 = arith.constant 0 : index
    %c0_2 = arith.constant 0 : index
    %3 = vector.load %arg2[%c0, %c0_1, %c0_2] : memref<8x8x16xf32, #tpu.memory_space<vmem>>, vector<8x8x16xf32>
    %4 = vector.shape_cast %3 : vector<8x8x16xf32> to vector<64x16xf32>
    %c0_3 = arith.constant 0 : index
    %c0_4 = arith.constant 0 : index
    %5 = vector.load %arg3[%c0_3, %c0_4] : memref<16x96xf32, #tpu.memory_space<vmem>>, vector<16x96xf32>
    %cst = arith.constant dense<0.000000e+00> : vector<64x96xf32>
    %6 = tpu.matmul %4, %5, %cst {dimension_numbers = #tpu.dot_dimension_numbers<[1], [0], [0], [1], [0, 0, 1, 1], [], []>} : vector<64x16xf32>, vector<16x96xf32>, vector<64x96xf32> -> vector<64x96xf32>
    %c0_5 = arith.constant 0 : index
    %c0_6 = arith.constant 0 : index
    %7 = vector.load %arg4[%c0_5, %c0_6] : memref<32x96xf32, #tpu.memory_space<vmem>>, vector<32x96xf32>
    %c0_7 = arith.constant 0 : index
    %c0_8 = arith.constant 0 : index
    %8 = vector.load %arg8[%c0_7, %c0_8] : memref<8x32xf32, #tpu.memory_space<vmem>>, vector<8x32xf32>
    %9 = vector.extract_strided_slice %6 {offsets = [0, 0], sizes = [8, 96], strides = [1, 1]} : vector<64x96xf32> to vector<8x96xf32>
    %cst_9 = arith.constant dense<0.000000e+00> : vector<8x96xf32>
    %10 = tpu.matmul %8, %7, %cst_9 {dimension_numbers = #tpu.dot_dimension_numbers<[1], [0], [0], [1], [0, 0, 1, 1], [], []>} : vector<8x32xf32>, vector<32x96xf32>, vector<8x96xf32> -> vector<8x96xf32>
    %11 = vector.extract_strided_slice %9 {offsets = [0, 0], sizes = [8, 32], strides = [1, 1]} : vector<8x96xf32> to vector<8x32xf32>
    %12 = vector.extract_strided_slice %10 {offsets = [0, 0], sizes = [8, 32], strides = [1, 1]} : vector<8x96xf32> to vector<8x32xf32>
    %13 = arith.addf %11, %12 : vector<8x32xf32>
    %14 = arith.negf %13 : vector<8x32xf32>
    %15 = math.exp %14 : vector<8x32xf32>
    %cst_10 = arith.constant 1.000000e+00 : f32
    %16 = vector.broadcast %cst_10 : f32 to vector<8x32xf32>
    %17 = arith.addf %16, %15 : vector<8x32xf32>
    %18 = arith.divf %16, %17 : vector<8x32xf32>
    %19 = vector.extract_strided_slice %9 {offsets = [0, 32], sizes = [8, 32], strides = [1, 1]} : vector<8x96xf32> to vector<8x32xf32>
    %20 = vector.extract_strided_slice %10 {offsets = [0, 32], sizes = [8, 32], strides = [1, 1]} : vector<8x96xf32> to vector<8x32xf32>
    %21 = arith.addf %19, %20 : vector<8x32xf32>
    %22 = arith.negf %21 : vector<8x32xf32>
    %23 = math.exp %22 : vector<8x32xf32>
    %cst_11 = arith.constant 1.000000e+00 : f32
    %24 = vector.broadcast %cst_11 : f32 to vector<8x32xf32>
    %25 = arith.addf %24, %23 : vector<8x32xf32>
    %26 = arith.divf %24, %25 : vector<8x32xf32>
    %27 = vector.extract_strided_slice %9 {offsets = [0, 64], sizes = [8, 32], strides = [1, 1]} : vector<8x96xf32> to vector<8x32xf32>
    %28 = vector.extract_strided_slice %10 {offsets = [0, 64], sizes = [8, 32], strides = [1, 1]} : vector<8x96xf32> to vector<8x32xf32>
    %29 = arith.mulf %18, %28 : vector<8x32xf32>
    %30 = arith.addf %27, %29 : vector<8x32xf32>
    %31 = math.tanh %30 : vector<8x32xf32>
    %cst_12 = arith.constant 1.000000e+00 : f32
    %32 = vector.broadcast %cst_12 : f32 to vector<8x32xf32>
    %33 = arith.subf %32, %26 : vector<8x32xf32>
    %34 = arith.mulf %33, %31 : vector<8x32xf32>
    %35 = arith.mulf %26, %8 : vector<8x32xf32>
    %36 = arith.addf %34, %35 : vector<8x32xf32>
    %37 = vector.extract_strided_slice %6 {offsets = [8, 0], sizes = [8, 96], strides = [1, 1]} : vector<64x96xf32> to vector<8x96xf32>
    %cst_13 = arith.constant dense<0.000000e+00> : vector<8x96xf32>
    %38 = tpu.matmul %36, %7, %cst_13 {dimension_numbers = #tpu.dot_dimension_numbers<[1], [0], [0], [1], [0, 0, 1, 1], [], []>} : vector<8x32xf32>, vector<32x96xf32>, vector<8x96xf32> -> vector<8x96xf32>
    %39 = vector.extract_strided_slice %37 {offsets = [0, 0], sizes = [8, 32], strides = [1, 1]} : vector<8x96xf32> to vector<8x32xf32>
    %40 = vector.extract_strided_slice %38 {offsets = [0, 0], sizes = [8, 32], strides = [1, 1]} : vector<8x96xf32> to vector<8x32xf32>
    %41 = arith.addf %39, %40 : vector<8x32xf32>
    %42 = arith.negf %41 : vector<8x32xf32>
    %43 = math.exp %42 : vector<8x32xf32>
    %cst_14 = arith.constant 1.000000e+00 : f32
    %44 = vector.broadcast %cst_14 : f32 to vector<8x32xf32>
    %45 = arith.addf %44, %43 : vector<8x32xf32>
    %46 = arith.divf %44, %45 : vector<8x32xf32>
    %47 = vector.extract_strided_slice %37 {offsets = [0, 32], sizes = [8, 32], strides = [1, 1]} : vector<8x96xf32> to vector<8x32xf32>
    %48 = vector.extract_strided_slice %38 {offsets = [0, 32], sizes = [8, 32], strides = [1, 1]} : vector<8x96xf32> to vector<8x32xf32>
    %49 = arith.addf %47, %48 : vector<8x32xf32>
    %50 = arith.negf %49 : vector<8x32xf32>
    %51 = math.exp %50 : vector<8x32xf32>
    %cst_15 = arith.constant 1.000000e+00 : f32
    %52 = vector.broadcast %cst_15 : f32 to vector<8x32xf32>
    %53 = arith.addf %52, %51 : vector<8x32xf32>
    %54 = arith.divf %52, %53 : vector<8x32xf32>
    %55 = vector.extract_strided_slice %37 {offsets = [0, 64], sizes = [8, 32], strides = [1, 1]} : vector<8x96xf32> to vector<8x32xf32>
    %56 = vector.extract_strided_slice %38 {offsets = [0, 64], sizes = [8, 32], strides = [1, 1]} : vector<8x96xf32> to vector<8x32xf32>
    %57 = arith.mulf %46, %56 : vector<8x32xf32>
    %58 = arith.addf %55, %57 : vector<8x32xf32>
    %59 = math.tanh %58 : vector<8x32xf32>
    %cst_16 = arith.constant 1.000000e+00 : f32
    %60 = vector.broadcast %cst_16 : f32 to vector<8x32xf32>
    %61 = arith.subf %60, %54 : vector<8x32xf32>
    %62 = arith.mulf %61, %59 : vector<8x32xf32>
    %63 = arith.mulf %54, %36 : vector<8x32xf32>
    %64 = arith.addf %62, %63 : vector<8x32xf32>
    %65 = vector.extract_strided_slice %6 {offsets = [16, 0], sizes = [8, 96], strides = [1, 1]} : vector<64x96xf32> to vector<8x96xf32>
    %cst_17 = arith.constant dense<0.000000e+00> : vector<8x96xf32>
    %66 = tpu.matmul %64, %7, %cst_17 {dimension_numbers = #tpu.dot_dimension_numbers<[1], [0], [0], [1], [0, 0, 1, 1], [], []>} : vector<8x32xf32>, vector<32x96xf32>, vector<8x96xf32> -> vector<8x96xf32>
    %67 = vector.extract_strided_slice %65 {offsets = [0, 0], sizes = [8, 32], strides = [1, 1]} : vector<8x96xf32> to vector<8x32xf32>
    %68 = vector.extract_strided_slice %66 {offsets = [0, 0], sizes = [8, 32], strides = [1, 1]} : vector<8x96xf32> to vector<8x32xf32>
    %69 = arith.addf %67, %68 : vector<8x32xf32>
    %70 = arith.negf %69 : vector<8x32xf32>
    %71 = math.exp %70 : vector<8x32xf32>
    %cst_18 = arith.constant 1.000000e+00 : f32
    %72 = vector.broadcast %cst_18 : f32 to vector<8x32xf32>
    %73 = arith.addf %72, %71 : vector<8x32xf32>
    %74 = arith.divf %72, %73 : vector<8x32xf32>
    %75 = vector.extract_strided_slice %65 {offsets = [0, 32], sizes = [8, 32], strides = [1, 1]} : vector<8x96xf32> to vector<8x32xf32>
    %76 = vector.extract_strided_slice %66 {offsets = [0, 32], sizes = [8, 32], strides = [1, 1]} : vector<8x96xf32> to vector<8x32xf32>
    %77 = arith.addf %75, %76 : vector<8x32xf32>
    %78 = arith.negf %77 : vector<8x32xf32>
    %79 = math.exp %78 : vector<8x32xf32>
    %cst_19 = arith.constant 1.000000e+00 : f32
    %80 = vector.broadcast %cst_19 : f32 to vector<8x32xf32>
    %81 = arith.addf %80, %79 : vector<8x32xf32>
    %82 = arith.divf %80, %81 : vector<8x32xf32>
    %83 = vector.extract_strided_slice %65 {offsets = [0, 64], sizes = [8, 32], strides = [1, 1]} : vector<8x96xf32> to vector<8x32xf32>
    %84 = vector.extract_strided_slice %66 {offsets = [0, 64], sizes = [8, 32], strides = [1, 1]} : vector<8x96xf32> to vector<8x32xf32>
    %85 = arith.mulf %74, %84 : vector<8x32xf32>
    %86 = arith.addf %83, %85 : vector<8x32xf32>
    %87 = math.tanh %86 : vector<8x32xf32>
    %cst_20 = arith.constant 1.000000e+00 : f32
    %88 = vector.broadcast %cst_20 : f32 to vector<8x32xf32>
    %89 = arith.subf %88, %82 : vector<8x32xf32>
    %90 = arith.mulf %89, %87 : vector<8x32xf32>
    %91 = arith.mulf %82, %64 : vector<8x32xf32>
    %92 = arith.addf %90, %91 : vector<8x32xf32>
    %93 = vector.extract_strided_slice %6 {offsets = [24, 0], sizes = [8, 96], strides = [1, 1]} : vector<64x96xf32> to vector<8x96xf32>
    %cst_21 = arith.constant dense<0.000000e+00> : vector<8x96xf32>
    %94 = tpu.matmul %92, %7, %cst_21 {dimension_numbers = #tpu.dot_dimension_numbers<[1], [0], [0], [1], [0, 0, 1, 1], [], []>} : vector<8x32xf32>, vector<32x96xf32>, vector<8x96xf32> -> vector<8x96xf32>
    %95 = vector.extract_strided_slice %93 {offsets = [0, 0], sizes = [8, 32], strides = [1, 1]} : vector<8x96xf32> to vector<8x32xf32>
    %96 = vector.extract_strided_slice %94 {offsets = [0, 0], sizes = [8, 32], strides = [1, 1]} : vector<8x96xf32> to vector<8x32xf32>
    %97 = arith.addf %95, %96 : vector<8x32xf32>
    %98 = arith.negf %97 : vector<8x32xf32>
    %99 = math.exp %98 : vector<8x32xf32>
    %cst_22 = arith.constant 1.000000e+00 : f32
    %100 = vector.broadcast %cst_22 : f32 to vector<8x32xf32>
    %101 = arith.addf %100, %99 : vector<8x32xf32>
    %102 = arith.divf %100, %101 : vector<8x32xf32>
    %103 = vector.extract_strided_slice %93 {offsets = [0, 32], sizes = [8, 32], strides = [1, 1]} : vector<8x96xf32> to vector<8x32xf32>
    %104 = vector.extract_strided_slice %94 {offsets = [0, 32], sizes = [8, 32], strides = [1, 1]} : vector<8x96xf32> to vector<8x32xf32>
    %105 = arith.addf %103, %104 : vector<8x32xf32>
    %106 = arith.negf %105 : vector<8x32xf32>
    %107 = math.exp %106 : vector<8x32xf32>
    %cst_23 = arith.constant 1.000000e+00 : f32
    %108 = vector.broadcast %cst_23 : f32 to vector<8x32xf32>
    %109 = arith.addf %108, %107 : vector<8x32xf32>
    %110 = arith.divf %108, %109 : vector<8x32xf32>
    %111 = vector.extract_strided_slice %93 {offsets = [0, 64], sizes = [8, 32], strides = [1, 1]} : vector<8x96xf32> to vector<8x32xf32>
    %112 = vector.extract_strided_slice %94 {offsets = [0, 64], sizes = [8, 32], strides = [1, 1]} : vector<8x96xf32> to vector<8x32xf32>
    %113 = arith.mulf %102, %112 : vector<8x32xf32>
    %114 = arith.addf %111, %113 : vector<8x32xf32>
    %115 = math.tanh %114 : vector<8x32xf32>
    %cst_24 = arith.constant 1.000000e+00 : f32
    %116 = vector.broadcast %cst_24 : f32 to vector<8x32xf32>
    %117 = arith.subf %116, %110 : vector<8x32xf32>
    %118 = arith.mulf %117, %115 : vector<8x32xf32>
    %119 = arith.mulf %110, %92 : vector<8x32xf32>
    %120 = arith.addf %118, %119 : vector<8x32xf32>
    %121 = vector.extract_strided_slice %6 {offsets = [32, 0], sizes = [8, 96], strides = [1, 1]} : vector<64x96xf32> to vector<8x96xf32>
    %cst_25 = arith.constant dense<0.000000e+00> : vector<8x96xf32>
    %122 = tpu.matmul %120, %7, %cst_25 {dimension_numbers = #tpu.dot_dimension_numbers<[1], [0], [0], [1], [0, 0, 1, 1], [], []>} : vector<8x32xf32>, vector<32x96xf32>, vector<8x96xf32> -> vector<8x96xf32>
    %123 = vector.extract_strided_slice %121 {offsets = [0, 0], sizes = [8, 32], strides = [1, 1]} : vector<8x96xf32> to vector<8x32xf32>
    %124 = vector.extract_strided_slice %122 {offsets = [0, 0], sizes = [8, 32], strides = [1, 1]} : vector<8x96xf32> to vector<8x32xf32>
    %125 = arith.addf %123, %124 : vector<8x32xf32>
    %126 = arith.negf %125 : vector<8x32xf32>
    %127 = math.exp %126 : vector<8x32xf32>
    %cst_26 = arith.constant 1.000000e+00 : f32
    %128 = vector.broadcast %cst_26 : f32 to vector<8x32xf32>
    %129 = arith.addf %128, %127 : vector<8x32xf32>
    %130 = arith.divf %128, %129 : vector<8x32xf32>
    %131 = vector.extract_strided_slice %121 {offsets = [0, 32], sizes = [8, 32], strides = [1, 1]} : vector<8x96xf32> to vector<8x32xf32>
    %132 = vector.extract_strided_slice %122 {offsets = [0, 32], sizes = [8, 32], strides = [1, 1]} : vector<8x96xf32> to vector<8x32xf32>
    %133 = arith.addf %131, %132 : vector<8x32xf32>
    %134 = arith.negf %133 : vector<8x32xf32>
    %135 = math.exp %134 : vector<8x32xf32>
    %cst_27 = arith.constant 1.000000e+00 : f32
    %136 = vector.broadcast %cst_27 : f32 to vector<8x32xf32>
    %137 = arith.addf %136, %135 : vector<8x32xf32>
    %138 = arith.divf %136, %137 : vector<8x32xf32>
    %139 = vector.extract_strided_slice %121 {offsets = [0, 64], sizes = [8, 32], strides = [1, 1]} : vector<8x96xf32> to vector<8x32xf32>
    %140 = vector.extract_strided_slice %122 {offsets = [0, 64], sizes = [8, 32], strides = [1, 1]} : vector<8x96xf32> to vector<8x32xf32>
    %141 = arith.mulf %130, %140 : vector<8x32xf32>
    %142 = arith.addf %139, %141 : vector<8x32xf32>
    %143 = math.tanh %142 : vector<8x32xf32>
    %cst_28 = arith.constant 1.000000e+00 : f32
    %144 = vector.broadcast %cst_28 : f32 to vector<8x32xf32>
    %145 = arith.subf %144, %138 : vector<8x32xf32>
    %146 = arith.mulf %145, %143 : vector<8x32xf32>
    %147 = arith.mulf %138, %120 : vector<8x32xf32>
    %148 = arith.addf %146, %147 : vector<8x32xf32>
    %149 = vector.extract_strided_slice %6 {offsets = [40, 0], sizes = [8, 96], strides = [1, 1]} : vector<64x96xf32> to vector<8x96xf32>
    %cst_29 = arith.constant dense<0.000000e+00> : vector<8x96xf32>
    %150 = tpu.matmul %148, %7, %cst_29 {dimension_numbers = #tpu.dot_dimension_numbers<[1], [0], [0], [1], [0, 0, 1, 1], [], []>} : vector<8x32xf32>, vector<32x96xf32>, vector<8x96xf32> -> vector<8x96xf32>
    %151 = vector.extract_strided_slice %149 {offsets = [0, 0], sizes = [8, 32], strides = [1, 1]} : vector<8x96xf32> to vector<8x32xf32>
    %152 = vector.extract_strided_slice %150 {offsets = [0, 0], sizes = [8, 32], strides = [1, 1]} : vector<8x96xf32> to vector<8x32xf32>
    %153 = arith.addf %151, %152 : vector<8x32xf32>
    %154 = arith.negf %153 : vector<8x32xf32>
    %155 = math.exp %154 : vector<8x32xf32>
    %cst_30 = arith.constant 1.000000e+00 : f32
    %156 = vector.broadcast %cst_30 : f32 to vector<8x32xf32>
    %157 = arith.addf %156, %155 : vector<8x32xf32>
    %158 = arith.divf %156, %157 : vector<8x32xf32>
    %159 = vector.extract_strided_slice %149 {offsets = [0, 32], sizes = [8, 32], strides = [1, 1]} : vector<8x96xf32> to vector<8x32xf32>
    %160 = vector.extract_strided_slice %150 {offsets = [0, 32], sizes = [8, 32], strides = [1, 1]} : vector<8x96xf32> to vector<8x32xf32>
    %161 = arith.addf %159, %160 : vector<8x32xf32>
    %162 = arith.negf %161 : vector<8x32xf32>
    %163 = math.exp %162 : vector<8x32xf32>
    %cst_31 = arith.constant 1.000000e+00 : f32
    %164 = vector.broadcast %cst_31 : f32 to vector<8x32xf32>
    %165 = arith.addf %164, %163 : vector<8x32xf32>
    %166 = arith.divf %164, %165 : vector<8x32xf32>
    %167 = vector.extract_strided_slice %149 {offsets = [0, 64], sizes = [8, 32], strides = [1, 1]} : vector<8x96xf32> to vector<8x32xf32>
    %168 = vector.extract_strided_slice %150 {offsets = [0, 64], sizes = [8, 32], strides = [1, 1]} : vector<8x96xf32> to vector<8x32xf32>
    %169 = arith.mulf %158, %168 : vector<8x32xf32>
    %170 = arith.addf %167, %169 : vector<8x32xf32>
    %171 = math.tanh %170 : vector<8x32xf32>
    %cst_32 = arith.constant 1.000000e+00 : f32
    %172 = vector.broadcast %cst_32 : f32 to vector<8x32xf32>
    %173 = arith.subf %172, %166 : vector<8x32xf32>
    %174 = arith.mulf %173, %171 : vector<8x32xf32>
    %175 = arith.mulf %166, %148 : vector<8x32xf32>
    %176 = arith.addf %174, %175 : vector<8x32xf32>
    %177 = vector.extract_strided_slice %6 {offsets = [48, 0], sizes = [8, 96], strides = [1, 1]} : vector<64x96xf32> to vector<8x96xf32>
    %cst_33 = arith.constant dense<0.000000e+00> : vector<8x96xf32>
    %178 = tpu.matmul %176, %7, %cst_33 {dimension_numbers = #tpu.dot_dimension_numbers<[1], [0], [0], [1], [0, 0, 1, 1], [], []>} : vector<8x32xf32>, vector<32x96xf32>, vector<8x96xf32> -> vector<8x96xf32>
    %179 = vector.extract_strided_slice %177 {offsets = [0, 0], sizes = [8, 32], strides = [1, 1]} : vector<8x96xf32> to vector<8x32xf32>
    %180 = vector.extract_strided_slice %178 {offsets = [0, 0], sizes = [8, 32], strides = [1, 1]} : vector<8x96xf32> to vector<8x32xf32>
    %181 = arith.addf %179, %180 : vector<8x32xf32>
    %182 = arith.negf %181 : vector<8x32xf32>
    %183 = math.exp %182 : vector<8x32xf32>
    %cst_34 = arith.constant 1.000000e+00 : f32
    %184 = vector.broadcast %cst_34 : f32 to vector<8x32xf32>
    %185 = arith.addf %184, %183 : vector<8x32xf32>
    %186 = arith.divf %184, %185 : vector<8x32xf32>
    %187 = vector.extract_strided_slice %177 {offsets = [0, 32], sizes = [8, 32], strides = [1, 1]} : vector<8x96xf32> to vector<8x32xf32>
    %188 = vector.extract_strided_slice %178 {offsets = [0, 32], sizes = [8, 32], strides = [1, 1]} : vector<8x96xf32> to vector<8x32xf32>
    %189 = arith.addf %187, %188 : vector<8x32xf32>
    %190 = arith.negf %189 : vector<8x32xf32>
    %191 = math.exp %190 : vector<8x32xf32>
    %cst_35 = arith.constant 1.000000e+00 : f32
    %192 = vector.broadcast %cst_35 : f32 to vector<8x32xf32>
    %193 = arith.addf %192, %191 : vector<8x32xf32>
    %194 = arith.divf %192, %193 : vector<8x32xf32>
    %195 = vector.extract_strided_slice %177 {offsets = [0, 64], sizes = [8, 32], strides = [1, 1]} : vector<8x96xf32> to vector<8x32xf32>
    %196 = vector.extract_strided_slice %178 {offsets = [0, 64], sizes = [8, 32], strides = [1, 1]} : vector<8x96xf32> to vector<8x32xf32>
    %197 = arith.mulf %186, %196 : vector<8x32xf32>
    %198 = arith.addf %195, %197 : vector<8x32xf32>
    %199 = math.tanh %198 : vector<8x32xf32>
    %cst_36 = arith.constant 1.000000e+00 : f32
    %200 = vector.broadcast %cst_36 : f32 to vector<8x32xf32>
    %201 = arith.subf %200, %194 : vector<8x32xf32>
    %202 = arith.mulf %201, %199 : vector<8x32xf32>
    %203 = arith.mulf %194, %176 : vector<8x32xf32>
    %204 = arith.addf %202, %203 : vector<8x32xf32>
    %205 = vector.extract_strided_slice %6 {offsets = [56, 0], sizes = [8, 96], strides = [1, 1]} : vector<64x96xf32> to vector<8x96xf32>
    %cst_37 = arith.constant dense<0.000000e+00> : vector<8x96xf32>
    %206 = tpu.matmul %204, %7, %cst_37 {dimension_numbers = #tpu.dot_dimension_numbers<[1], [0], [0], [1], [0, 0, 1, 1], [], []>} : vector<8x32xf32>, vector<32x96xf32>, vector<8x96xf32> -> vector<8x96xf32>
    %207 = vector.extract_strided_slice %205 {offsets = [0, 0], sizes = [8, 32], strides = [1, 1]} : vector<8x96xf32> to vector<8x32xf32>
    %208 = vector.extract_strided_slice %206 {offsets = [0, 0], sizes = [8, 32], strides = [1, 1]} : vector<8x96xf32> to vector<8x32xf32>
    %209 = arith.addf %207, %208 : vector<8x32xf32>
    %210 = arith.negf %209 : vector<8x32xf32>
    %211 = math.exp %210 : vector<8x32xf32>
    %cst_38 = arith.constant 1.000000e+00 : f32
    %212 = vector.broadcast %cst_38 : f32 to vector<8x32xf32>
    %213 = arith.addf %212, %211 : vector<8x32xf32>
    %214 = arith.divf %212, %213 : vector<8x32xf32>
    %215 = vector.extract_strided_slice %205 {offsets = [0, 32], sizes = [8, 32], strides = [1, 1]} : vector<8x96xf32> to vector<8x32xf32>
    %216 = vector.extract_strided_slice %206 {offsets = [0, 32], sizes = [8, 32], strides = [1, 1]} : vector<8x96xf32> to vector<8x32xf32>
    %217 = arith.addf %215, %216 : vector<8x32xf32>
    %218 = arith.negf %217 : vector<8x32xf32>
    %219 = math.exp %218 : vector<8x32xf32>
    %cst_39 = arith.constant 1.000000e+00 : f32
    %220 = vector.broadcast %cst_39 : f32 to vector<8x32xf32>
    %221 = arith.addf %220, %219 : vector<8x32xf32>
    %222 = arith.divf %220, %221 : vector<8x32xf32>
    %223 = vector.extract_strided_slice %205 {offsets = [0, 64], sizes = [8, 32], strides = [1, 1]} : vector<8x96xf32> to vector<8x32xf32>
    %224 = vector.extract_strided_slice %206 {offsets = [0, 64], sizes = [8, 32], strides = [1, 1]} : vector<8x96xf32> to vector<8x32xf32>
    %225 = arith.mulf %214, %224 : vector<8x32xf32>
    %226 = arith.addf %223, %225 : vector<8x32xf32>
    %227 = math.tanh %226 : vector<8x32xf32>
    %cst_40 = arith.constant 1.000000e+00 : f32
    %228 = vector.broadcast %cst_40 : f32 to vector<8x32xf32>
    %229 = arith.subf %228, %222 : vector<8x32xf32>
    %230 = arith.mulf %229, %227 : vector<8x32xf32>
    %231 = arith.mulf %222, %204 : vector<8x32xf32>
    %232 = arith.addf %230, %231 : vector<8x32xf32>
    %c0_41 = arith.constant 0 : index
    %c0_42 = arith.constant 0 : index
    %233 = vector.load %arg8[%c0_41, %c0_42] : memref<8x32xf32, #tpu.memory_space<vmem>>, vector<8x32xf32>
    tpu.vector_store %arg8[%c0_41, %c0_42], %232 {strides = array<i32>} : memref<8x32xf32, #tpu.memory_space<vmem>>, vector<8x32xf32>,
    %234 = tpu.concatenate %36, %64, %92, %120, %148, %176, %204, %232 in 1 : vector<8x32xf32>, vector<8x32xf32>, vector<8x32xf32>, vector<8x32xf32>, vector<8x32xf32>, vector<8x32xf32>, vector<8x32xf32>, vector<8x32xf32> -> vector<8x256xf32>
    %c0_43 = arith.constant 0 : index
    %c0_44 = arith.constant 0 : index
    %235 = vector.load %arg5[%c0_43, %c0_44] : memref<1x256xf32, #tpu.memory_space<vmem>>, vector<1x256xf32>
    %236 = vector.broadcast %235 : vector<1x256xf32> to vector<8x256xf32>
    %237 = arith.mulf %234, %236 : vector<8x256xf32>
    %c0_45 = arith.constant 0 : index
    %c0_46 = arith.constant 0 : index
    %238 = vector.load %arg6[%c0_45, %c0_46] : memref<1x256xf32, #tpu.memory_space<vmem>>, vector<1x256xf32>
    %239 = vector.broadcast %238 : vector<1x256xf32> to vector<8x256xf32>
    %240 = arith.addf %237, %239 : vector<8x256xf32>
    %c0_47 = arith.constant 0 : index
    %c0_48 = arith.constant 0 : index
    %241 = vector.load %arg7[%c0_47, %c0_48] : memref<8x256xf32, #tpu.memory_space<vmem>>, vector<8x256xf32>
    tpu.vector_store %arg7[%c0_47, %c0_48], %240 {strides = array<i32>} : memref<8x256xf32, #tpu.memory_space<vmem>>, vector<8x256xf32>,
    return
  }
  func.func @transform_0(%arg0: i32, %arg1: i32) -> (i32, i32, i32) {
    %c0_i32 = arith.constant 0 : i32
    %c0_i32_0 = arith.constant 0 : i32
    return %arg1, %arg0, %c0_i32 : i32, i32, i32
  }
  func.func @transform_1(%arg0: i32, %arg1: i32) -> (i32, i32) {
    %c0_i32 = arith.constant 0 : i32
    %c0_i32_0 = arith.constant 0 : i32
    %c0_i32_1 = arith.constant 0 : i32
    return %c0_i32, %c0_i32_0 : i32, i32
  }
  func.func @transform_2(%arg0: i32, %arg1: i32) -> (i32, i32) {
    %c0_i32 = arith.constant 0 : i32
    %c0_i32_0 = arith.constant 0 : i32
    %c0_i32_1 = arith.constant 0 : i32
    return %c0_i32, %c0_i32_0 : i32, i32
  }
  func.func @transform_3(%arg0: i32, %arg1: i32) -> (i32, i32) {
    %c0_i32 = arith.constant 0 : i32
    %c0_i32_0 = arith.constant 0 : i32
    %c0_i32_1 = arith.constant 0 : i32
    return %c0_i32, %c0_i32_0 : i32, i32
  }
  func.func @transform_4(%arg0: i32, %arg1: i32) -> (i32, i32) {
    %c0_i32 = arith.constant 0 : i32
    %c0_i32_0 = arith.constant 0 : i32
    %c0_i32_1 = arith.constant 0 : i32
    return %c0_i32, %c0_i32_0 : i32, i32
  }
  func.func @transform_5(%arg0: i32, %arg1: i32) -> (i32, i32) {
    %c0_i32 = arith.constant 0 : i32
    return %arg0, %arg1 : i32, i32
  }
}

</mosaic_0001>

<llo_original>
// kernel: tpu_custom_call.1
$region0: #{tpu_custom_call.1}
  #allocation0 [shape = 'u32[]', space=smem, size = 0x4, offset = 0x4, fixed_abs, tag = 'smem constant byte address 0x4 - core index']
  #allocation1 [shape = 'u32[144,128]{1,0:T(1,128)}', space=vmem, size = 0x12000, scoped, tag = 'internal scratch']
  #allocation2 [shape = 'f32[8,32]{1,0:T(8,128)}', space=vmem, size = 0x1000, scoped, tag = 'scratch operand']
  %s0 = inlined_call_operand.hbm [shape: f32[8,8,16], index: 0, kind: input, shape index: {}]
  %s1 = inlined_call_operand.hbm [shape: f32[16,96], index: 1, kind: input, shape index: {}]
  %s2 = inlined_call_operand.hbm [shape: f32[32,96], index: 2, kind: input, shape index: {}]
  %s3 = inlined_call_operand.vmem [shape: f32[1,256], index: 3, kind: input, shape index: {}]
  %s4 = inlined_call_operand.vmem [shape: f32[1,256], index: 4, kind: input, shape index: {}]
  %s5 = inlined_call_operand.hbm [shape: f32[8,256], index: 5, kind: output, shape index: {}]
  %s6 = sld [smem:[#allocation0]]
  $region46: #{tpu_custom_call.1} parent=0
    _
  %s8 = ssub.s32 1, %s6
  %s9 = scalar_select 0, %s8, %s6
  $region1: #{tpu_custom_call.1} parent=0
    #allocation3 [shape = 'u8[32768]{0}', space=vmem, size = 0x8000, scoped, tag = 'input window, operand 0, single buffered']
    #allocation4 [shape = 's32[1]{0}', space=sflag, size = 0x4, scoped, tag = 'scoped memory for tpu_custom_call.1']
    #allocation5 [shape = 's32[1]{0}', space=sflag, size = 0x4, scoped, tag = 'scoped memory for tpu_custom_call.1']
    #allocation6 [shape = 'u8[8192]{0}', space=vmem, size = 0x2000, scoped, tag = 'input window, operand 1, single buffered']
    #allocation7 [shape = 's32[1]{0}', space=sflag, size = 0x4, scoped, tag = 'scoped memory for tpu_custom_call.1']
    #allocation8 [shape = 'u8[16384]{0}', space=vmem, size = 0x4000, scoped, tag = 'input window, operand 2, single buffered']
    #allocation9 [shape = 'u8[8192]{0}', space=vmem, size = 0x2000, scoped, tag = 'output window, operand 0, single buffered']
    %10 = vsyncpa [#allocation4], 0
    %11 = vsyncpa [#allocation7], 0
    %12 = vsyncpa [#allocation5], 0
    // Predicated region
    $region2: #{tpu_custom_call.1} parent=1 // pred_check
      _
    $region3: #{tpu_custom_call.1} parent=1 // pred_check_branch
      %14 = sbr.rel (0) target = $region5
    $region4: #{tpu_custom_call.1} parent=1 // pred_region
      %s16 = ssub.s32 1024, 1024
      %17 = vsyncadd [#allocation4], %s16
      %s18 = sshll.u32 [#allocation3], 4
      %s19 = int_to_ptr.vmem [resolvable:$true] %s18
      %24 = dma.hbm_to_vmem [thread:$0]  %s0, 1024, %s19, [#allocation4], 128, 128, 8
    $region5: #{tpu_custom_call.1} parent=1 // pred_fallthru
      _
    // Predicated region
    $region6: #{tpu_custom_call.1} parent=1 // pred_check
      _
    $region7: #{tpu_custom_call.1} parent=1 // pred_check_branch
      %26 = sbr.rel (0) target = $region9
    $region8: #{tpu_custom_call.1} parent=1 // pred_region
      %s28 = ssub.s32 256, 256
      %29 = vsyncadd [#allocation7], %s28
      %s30 = sshll.u32 [#allocation6], 4
      %s31 = int_to_ptr.vmem [resolvable:$true] %s30
      %36 = dma.hbm_to_vmem [thread:$0]  %s1, 256, %s31, [#allocation7], 128, 128, 8
    $region9: #{tpu_custom_call.1} parent=1 // pred_fallthru
      _
    // Predicated region
    $region10: #{tpu_custom_call.1} parent=1 // pred_check
      _
    $region11: #{tpu_custom_call.1} parent=1 // pred_check_branch
      %38 = sbr.rel (0) target = $region13
    $region12: #{tpu_custom_call.1} parent=1 // pred_region
      %s40 = ssub.s32 512, 512
      %41 = vsyncadd [#allocation7], %s40
      %s42 = sshll.u32 [#allocation8], 4
      %s43 = int_to_ptr.vmem [resolvable:$true] %s42
      %48 = dma.hbm_to_vmem [thread:$0]  %s2, 512, %s43, [#allocation7], 128, 128, 8
    $region13: #{tpu_custom_call.1} parent=1 // pred_fallthru
      _
    // Predicated region
    $region14: #{tpu_custom_call.1} parent=1 // pred_check
      _
    $region15: #{tpu_custom_call.1} parent=1 // pred_check_branch
      %50 = sbr.rel (0) target = $region17
    $region16: #{tpu_custom_call.1} parent=1 // pred_region
      _
    $region17: #{tpu_custom_call.1} parent=1 // pred_fallthru
      _
    // Predicated region
    $region18: #{tpu_custom_call.1} parent=1 // pred_check
      _
    $region19: #{tpu_custom_call.1} parent=1 // pred_check_branch
      %52 = sbr.rel (0) target = $region21
    $region20: #{tpu_custom_call.1} parent=1 // pred_region
      _
    $region21: #{tpu_custom_call.1} parent=1 // pred_fallthru
      _
    // Predicated region
    $region22: #{tpu_custom_call.1} parent=1 // pred_check
      _
    $region23: #{tpu_custom_call.1} parent=1 // pred_check_branch
      %54 = sbr.rel (0) target = $region25
    $region24: #{tpu_custom_call.1} parent=1 // pred_region
      %55 = dma.done [#allocation4], 1024
    $region25: #{tpu_custom_call.1} parent=1 // pred_fallthru
      _
    // Predicated region
    $region26: #{tpu_custom_call.1} parent=1 // pred_check
      _
    $region27: #{tpu_custom_call.1} parent=1 // pred_check_branch
      %57 = sbr.rel (0) target = $region29
    $region28: #{tpu_custom_call.1} parent=1 // pred_region
      %58 = dma.done [#allocation7], 256
    $region29: #{tpu_custom_call.1} parent=1 // pred_fallthru
      _
    // Predicated region
    $region30: #{tpu_custom_call.1} parent=1 // pred_check
      _
    $region31: #{tpu_custom_call.1} parent=1 // pred_check_branch
      %60 = sbr.rel (0) target = $region33
    $region32: #{tpu_custom_call.1} parent=1 // pred_region
      %61 = dma.done [#allocation7], 512
    $region33: #{tpu_custom_call.1} parent=1 // pred_fallthru
      _
    %p62 = scmp.eq.s32.totalorder 0, 0
    // Predicated region
    $region34: #{tpu_custom_call.1} parent=1 // pred_check
      %p63 = pneg %p62
    $region35: #{tpu_custom_call.1} parent=1 // pred_check_branch
      %65 = sbr.rel (%p63) target = $region37
    $region36: #{tpu_custom_call.1} parent=1 // pred_region
      %vm66 = vcmask 261120
      %67 = vst.msk [vmem:[#allocation2] sm:$0xff] %vm66, 0.0
    $region37: #{tpu_custom_call.1} parent=1 // pred_fallthru
      _
    %v68 = vld [vmem:[#allocation3] sm:$0xff]
    %v69 = vld [vmem:[#allocation3 + $0x8] sm:$0xff]
    %v70 = vld [vmem:[#allocation3 + $0x10] sm:$0xff]
    %v71 = vld [vmem:[#allocation3 + $0x18] sm:$0xff]
    %v72 = vld [vmem:[#allocation3 + $0x20] sm:$0xff]
    %v73 = vld [vmem:[#allocation3 + $0x28] sm:$0xff]
    %v74 = vld [vmem:[#allocation3 + $0x30] sm:$0xff]
    %v75 = vld [vmem:[#allocation3 + $0x38] sm:$0xff]
    %v76 = vld [vmem:[#allocation6] sm:$0xff]
    %v77 = vld [vmem:[#allocation6 + $0x8] sm:$0xff]
    %vm78 = vcmask 130048
    %v80 = vsel %vm78, %v68, 0
    %v83 = vsel %vm78, %v69, 0
    %v86 = vsel %vm78, %v70, 0
    %v89 = vsel %vm78, %v71, 0
    %v92 = vsel %vm78, %v72, 0
    %v95 = vsel %vm78, %v73, 0
    %v98 = vsel %vm78, %v74, 0
    %v101 = vsel %vm78, %v75, 0
    %103 = vmatprep.subr.mxu0 0.0
    %104 = vmatpush1.msra.mxu0 %v76
    %105 = vmatprep.subr.mxu0 0.0
    %106 = vmatpush1.msra.mxu0 %v77
    %107 = vmatprep.subr.mxu0 0.0
    %108 = vmatpush1.msra.mxu0 0.0
    %109 = vmatprep.subr.mxu0 0.0
    %110 = vmatpush1.msra.mxu0 0.0
    %111 = vmatprep.subr.mxu0 0.0
    %112 = vmatpush1.msra.mxu0 0.0
    %113 = vmatprep.subr.mxu0 0.0
    %114 = vmatpush1.msra.mxu0 0.0
    %115 = vmatprep.subr.mxu0 0.0
    %116 = vmatpush1.msra.mxu0 0.0
    %117 = vmatprep.subr.mxu0 0.0
    %118 = vmatpush1.msra.mxu0 0.0
    %119 = vmatprep.subr.mxu0 0.0
    %120 = vmatpush1.msra.mxu0 0.0
    %121 = vmatprep.subr.mxu0 0.0
    %122 = vmatpush1.msra.mxu0 0.0
    %123 = vmatprep.subr.mxu0 0.0
    %124 = vmatpush1.msra.mxu0 0.0
    %125 = vmatprep.subr.mxu0 0.0
    %126 = vmatpush1.msra.mxu0 0.0
    %127 = vmatprep.subr.mxu0 0.0
    %128 = vmatpush1.msra.mxu0 0.0
    %129 = vmatprep.subr.mxu0 0.0
    %130 = vmatpush1.msra.mxu0 0.0
    %131 = vmatprep.subr.mxu0 0.0
    %132 = vmatpush1.msra.mxu0 0.0
    %133 = vmatprep.subr.mxu0 0.0
    %134 = vmatpush1.msra.mxu0 0.0
    %135 = vmatprep.subr.mxu0 0.0
    %136 = vmatpush1.msra.mxu0 0.0
    %137 = vmatprep.subr.mxu0 0.0
    %138 = vmatpush1.msra.mxu0 0.0
    %139 = vmatprep.subr.mxu0 0.0
    %140 = vmatpush1.msra.mxu0 0.0
    %141 = vmatprep.subr.mxu0 0.0
    %142 = vmatpush1.msra.mxu0 0.0
    %143 = vmatprep.subr.mxu0 0.0
    %144 = vmatpush1.msra.mxu0 0.0
    %145 = vmatprep.subr.mxu0 0.0
    %146 = vmatpush1.msra.mxu0 0.0
    %147 = vmatprep.subr.mxu0 0.0
    %148 = vmatpush1.msra.mxu0 0.0
    %149 = vmatprep.subr.mxu0 0.0
    %150 = vmatpush1.msra.mxu0 0.0
    %151 = vmatprep.subr.mxu0 0.0
    %152 = vmatpush1.msra.mxu0 0.0
    %153 = vmatprep.subr.mxu0 0.0
    %154 = vmatpush1.msra.mxu0 0.0
    %155 = vmatprep.subr.mxu0 0.0
    %156 = vmatpush1.msra.mxu0 0.0
    %157 = vmatprep.subr.mxu0 0.0
    %158 = vmatpush1.msra.mxu0 0.0
    %159 = vmatprep.subr.mxu0 0.0
    %160 = vmatpush1.msra.mxu0 0.0
    %161 = vmatprep.subr.mxu0 0.0
    %162 = vmatpush1.msra.mxu0 0.0
    %163 = vmatprep.subr.mxu0 0.0
    %164 = vmatpush1.msra.mxu0 0.0
    %165 = vmatprep.subr.mxu0 0.0
    %166 = vmatpush1.msra.mxu0 0.0
    %167 = vmatprep.mubr.f32.mxu0 0.0
    %168 = vmatmul.mubr.f32.gmra.mrb[0].mxu0 %v80
    %v169 = vpop.f32.mrb[0].mxu0
    %v170 = vadd.f32 0.0, %v169
    %v171 = vpop.f32.mrb[0].mxu0
    %172 = vmatprep.mubr.f32.mxu0 0.0
    %173 = vmatmul.mubr.f32.gmra.mrb[0].mxu0 %v83
    %v174 = vpop.f32.mrb[0].mxu0
    %v175 = vadd.f32 0.0, %v174
    %v176 = vpop.f32.mrb[0].mxu0
    %177 = vmatprep.mubr.f32.mxu0 0.0
    %178 = vmatmul.mubr.f32.gmra.mrb[0].mxu0 %v86
    %v179 = vpop.f32.mrb[0].mxu0
    %v180 = vadd.f32 0.0, %v179
    %v181 = vpop.f32.mrb[0].mxu0
    %182 = vmatprep.mubr.f32.mxu0 0.0
    %183 = vmatmul.mubr.f32.gmra.mrb[0].mxu0 %v89
    %v184 = vpop.f32.mrb[0].mxu0
    %v185 = vadd.f32 0.0, %v184
    %v186 = vpop.f32.mrb[0].mxu0
    %187 = vmatprep.mubr.f32.mxu0 0.0
    %188 = vmatmul.mubr.f32.gmra.mrb[0].mxu0 %v92
    %v189 = vpop.f32.mrb[0].mxu0
    %v190 = vadd.f32 0.0, %v189
    %v191 = vpop.f32.mrb[0].mxu0
    %192 = vmatprep.mubr.f32.mxu0 0.0
    %193 = vmatmul.mubr.f32.gmra.mrb[0].mxu0 %v95
    %v194 = vpop.f32.mrb[0].mxu0
    %v195 = vadd.f32 0.0, %v194
    %v196 = vpop.f32.mrb[0].mxu0
    %197 = vmatprep.mubr.f32.mxu0 0.0
    %198 = vmatmul.mubr.f32.gmra.mrb[0].mxu0 %v98
    %v199 = vpop.f32.mrb[0].mxu0
    %v200 = vadd.f32 0.0, %v199
    %v201 = vpop.f32.mrb[0].mxu0
    %202 = vmatprep.mubr.f32.mxu0 0.0
    %203 = vmatmul.mubr.f32.gmra.mrb[0].mxu0 %v101
    %v204 = vpop.f32.mrb[0].mxu0
    %v205 = vadd.f32 0.0, %v204
    %v206 = vpop.f32.mrb[0].mxu0
    %207 = vdwg.mxu0
    %v208 = vld [vmem:[#allocation8] sm:$0xff]
    %v209 = vld [vmem:[#allocation8 + $0x8] sm:$0xff]
    %v210 = vld [vmem:[#allocation8 + $0x10] sm:$0xff]
    %v211 = vld [vmem:[#allocation8 + $0x18] sm:$0xff]
    %v212 = vld [vmem:[#allocation2] sm:$0xff]
    %vm213 = vcmask 261120
    %v215 = vsel %vm213, %v212, 0
    %217 = vmatprep.subr.mxu0 0.0
    %218 = vmatpush1.msra.mxu0 %v208
    %219 = vmatprep.subr.mxu0 0.0
    %220 = vmatpush1.msra.mxu0 %v209
    %221 = vmatprep.subr.mxu0 0.0
    %222 = vmatpush1.msra.mxu0 %v210
    %223 = vmatprep.subr.mxu0 0.0
    %224 = vmatpush1.msra.mxu0 %v211
    %225 = vmatprep.subr.mxu0 0.0
    %226 = vmatpush1.msra.mxu0 0.0
    %227 = vmatprep.subr.mxu0 0.0
    %228 = vmatpush1.msra.mxu0 0.0
    %229 = vmatprep.subr.mxu0 0.0
    %230 = vmatpush1.msra.mxu0 0.0
    %231 = vmatprep.subr.mxu0 0.0
    %232 = vmatpush1.msra.mxu0 0.0
    %233 = vmatprep.subr.mxu0 0.0
    %234 = vmatpush1.msra.mxu0 0.0
    %235 = vmatprep.subr.mxu0 0.0
    %236 = vmatpush1.msra.mxu0 0.0
    %237 = vmatprep.subr.mxu0 0.0
    %238 = vmatpush1.msra.mxu0 0.0
    %239 = vmatprep.subr.mxu0 0.0
    %240 = vmatpush1.msra.mxu0 0.0
    %241 = vmatprep.subr.mxu0 0.0
    %242 = vmatpush1.msra.mxu0 0.0
    %243 = vmatprep.subr.mxu0 0.0
    %244 = vmatpush1.msra.mxu0 0.0
    %245 = vmatprep.subr.mxu0 0.0
    %246 = vmatpush1.msra.mxu0 0.0
    %247 = vmatprep.subr.mxu0 0.0
    %248 = vmatpush1.msra.mxu0 0.0
    %249 = vmatprep.subr.mxu0 0.0
    %250 = vmatpush1.msra.mxu0 0.0
    %251 = vmatprep.subr.mxu0 0.0
    %252 = vmatpush1.msra.mxu0 0.0
    %253 = vmatprep.subr.mxu0 0.0
    %254 = vmatpush1.msra.mxu0 0.0
    %255 = vmatprep.subr.mxu0 0.0
    %256 = vmatpush1.msra.mxu0 0.0
    %257 = vmatprep.subr.mxu0 0.0
    %258 = vmatpush1.msra.mxu0 0.0
    %259 = vmatprep.subr.mxu0 0.0
    %260 = vmatpush1.msra.mxu0 0.0
    %261 = vmatprep.subr.mxu0 0.0
    %262 = vmatpush1.msra.mxu0 0.0
    %263 = vmatprep.subr.mxu0 0.0
    %264 = vmatpush1.msra.mxu0 0.0
    %265 = vmatprep.subr.mxu0 0.0
    %266 = vmatpush1.msra.mxu0 0.0
    %267 = vmatprep.subr.mxu0 0.0
    %268 = vmatpush1.msra.mxu0 0.0
    %269 = vmatprep.subr.mxu0 0.0
    %270 = vmatpush1.msra.mxu0 0.0
    %271 = vmatprep.subr.mxu0 0.0
    %272 = vmatpush1.msra.mxu0 0.0
    %273 = vmatprep.subr.mxu0 0.0
    %274 = vmatpush1.msra.mxu0 0.0
    %275 = vmatprep.subr.mxu0 0.0
    %276 = vmatpush1.msra.mxu0 0.0
    %277 = vmatprep.subr.mxu0 0.0
    %278 = vmatpush1.msra.mxu0 0.0
    %279 = vmatprep.subr.mxu0 0.0
    %280 = vmatpush1.msra.mxu0 0.0
    %281 = vmatprep.mubr.f32.mxu0 0.0
    %282 = vmatmul.mubr.f32.gmra.mrb[0].mxu0 %v215
    %v283 = vpop.f32.mrb[0].mxu0
    %v284 = vadd.f32 0.0, %v283
    %v285 = vpop.f32.mrb[0].mxu0
    %286 = vdwg.mxu0
    %v287 = vadd.f32 %v170, %v284
    %v288 = vxor.u32 %v287, 2147483648
    %v289 = vmul.f32 %v288, 1.442695
    %v290 = vpow.pop %v289
    %v291 = vadd.f32 %v290, 1.0
    %v292 = vrcp.pop %v291
    %v293 = vmul.f32 1.0, %v292
    %295 = vrot.lane.b32.xlu0 %v284, 64
    %v296 = vpop.permute.xlu0 %295
    %v298 = vmul.f32 %v293, %v296
    %300 = vrot.lane.b32.xlu0 %v298, 64
    %v301 = vpop.permute.xlu0 %300
    %v303 = vadd.f32 %v170, %v301
    %v304 = vtanh.pop %v303
    %v305 = vsub.f32 1.0, %v293
    %307 = vrot.lane.b32.xlu0 %v304, 96
    %v308 = vpop.permute.xlu0 %307
    %v310 = vmul.f32 %v305, %v308
    %311 = vrot.lane.b32.xlu0 %v212, 32
    %v312 = vpop.permute.xlu0 %311
    %v314 = vmul.f32 %v293, %v312
    %v315 = vadd.f32 %v310, %v314
    %317 = vrot.lane.b32.xlu0 %v315, 96
    %v318 = vpop.permute.xlu0 %317
    %v319 = vsel %vm213, %v318, 0
    %321 = vmatprep.subr.mxu0 0.0
    %322 = vmatpush1.msra.mxu0 %v208
    %323 = vmatprep.subr.mxu0 0.0
    %324 = vmatpush1.msra.mxu0 %v209
    %325 = vmatprep.subr.mxu0 0.0
    %326 = vmatpush1.msra.mxu0 %v210
    %327 = vmatprep.subr.mxu0 0.0
    %328 = vmatpush1.msra.mxu0 %v211
    %329 = vmatprep.subr.mxu0 0.0
    %330 = vmatpush1.msra.mxu0 0.0
    %331 = vmatprep.subr.mxu0 0.0
    %332 = vmatpush1.msra.mxu0 0.0
    %333 = vmatprep.subr.mxu0 0.0
    %334 = vmatpush1.msra.mxu0 0.0
    %335 = vmatprep.subr.mxu0 0.0
    %336 = vmatpush1.msra.mxu0 0.0
    %337 = vmatprep.subr.mxu0 0.0
    %338 = vmatpush1.msra.mxu0 0.0
    %339 = vmatprep.subr.mxu0 0.0
    %340 = vmatpush1.msra.mxu0 0.0
    %341 = vmatprep.subr.mxu0 0.0
    %342 = vmatpush1.msra.mxu0 0.0
    %343 = vmatprep.subr.mxu0 0.0
    %344 = vmatpush1.msra.mxu0 0.0
    %345 = vmatprep.subr.mxu0 0.0
    %346 = vmatpush1.msra.mxu0 0.0
    %347 = vmatprep.subr.mxu0 0.0
    %348 = vmatpush1.msra.mxu0 0.0
    %349 = vmatprep.subr.mxu0 0.0
    %350 = vmatpush1.msra.mxu0 0.0
    %351 = vmatprep.subr.mxu0 0.0
    %352 = vmatpush1.msra.mxu0 0.0
    %353 = vmatprep.subr.mxu0 0.0
    %354 = vmatpush1.msra.mxu0 0.0
    %355 = vmatprep.subr.mxu0 0.0
    %356 = vmatpush1.msra.mxu0 0.0
    %357 = vmatprep.subr.mxu0 0.0
    %358 = vmatpush1.msra.mxu0 0.0
    %359 = vmatprep.subr.mxu0 0.0
    %360 = vmatpush1.msra.mxu0 0.0
    %361 = vmatprep.subr.mxu0 0.0
    %362 = vmatpush1.msra.mxu0 0.0
    %363 = vmatprep.subr.mxu0 0.0
    %364 = vmatpush1.msra.mxu0 0.0
    %365 = vmatprep.subr.mxu0 0.0
    %366 = vmatpush1.msra.mxu0 0.0
    %367 = vmatprep.subr.mxu0 0.0
    %368 = vmatpush1.msra.mxu0 0.0
    %369 = vmatprep.subr.mxu0 0.0
    %370 = vmatpush1.msra.mxu0 0.0
    %371 = vmatprep.subr.mxu0 0.0
    %372 = vmatpush1.msra.mxu0 0.0
    %373 = vmatprep.subr.mxu0 0.0
    %374 = vmatpush1.msra.mxu0 0.0
    %375 = vmatprep.subr.mxu0 0.0
    %376 = vmatpush1.msra.mxu0 0.0
    %377 = vmatprep.subr.mxu0 0.0
    %378 = vmatpush1.msra.mxu0 0.0
    %379 = vmatprep.subr.mxu0 0.0
    %380 = vmatpush1.msra.mxu0 0.0
    %381 = vmatprep.subr.mxu0 0.0
    %382 = vmatpush1.msra.mxu0 0.0
    %383 = vmatprep.subr.mxu0 0.0
    %384 = vmatpush1.msra.mxu0 0.0
    %385 = vmatprep.mubr.f32.mxu0 0.0
    %386 = vmatmul.mubr.f32.gmra.mrb[0].mxu0 %v319
    %v387 = vpop.f32.mrb[0].mxu0
    %v388 = vadd.f32 0.0, %v387
    %v389 = vpop.f32.mrb[0].mxu0
    %390 = vdwg.mxu0
    %v391 = vadd.f32 %v175, %v388
    %v392 = vxor.u32 %v391, 2147483648
    %v393 = vmul.f32 %v392, 1.442695
    %v394 = vpow.pop %v393
    %v395 = vadd.f32 %v394, 1.0
    %v396 = vrcp.pop %v395
    %v397 = vmul.f32 1.0, %v396
    %399 = vrot.lane.b32.xlu0 %v388, 64
    %v400 = vpop.permute.xlu0 %399
    %v402 = vmul.f32 %v397, %v400
    %404 = vrot.lane.b32.xlu0 %v402, 64
    %v405 = vpop.permute.xlu0 %404
    %v407 = vadd.f32 %v175, %v405
    %v408 = vtanh.pop %v407
    %v409 = vsub.f32 1.0, %v397
    %411 = vrot.lane.b32.xlu0 %v408, 96
    %v412 = vpop.permute.xlu0 %411
    %v414 = vmul.f32 %v409, %v412
    %v415 = vmul.f32 %v397, %v315
    %v416 = vadd.f32 %v414, %v415
    %418 = vrot.lane.b32.xlu0 %v416, 96
    %v419 = vpop.permute.xlu0 %418
    %v420 = vsel %vm213, %v419, 0
    %422 = vmatprep.subr.mxu0 0.0
    %423 = vmatpush1.msra.mxu0 %v208
    %424 = vmatprep.subr.mxu0 0.0
    %425 = vmatpush1.msra.mxu0 %v209
    %426 = vmatprep.subr.mxu0 0.0
    %427 = vmatpush1.msra.mxu0 %v210
    %428 = vmatprep.subr.mxu0 0.0
    %429 = vmatpush1.msra.mxu0 %v211
    %430 = vmatprep.subr.mxu0 0.0
    %431 = vmatpush1.msra.mxu0 0.0
    %432 = vmatprep.subr.mxu0 0.0
    %433 = vmatpush1.msra.mxu0 0.0
    %434 = vmatprep.subr.mxu0 0.0
    %435 = vmatpush1.msra.mxu0 0.0
    %436 = vmatprep.subr.mxu0 0.0
    %437 = vmatpush1.msra.mxu0 0.0
    %438 = vmatprep.subr.mxu0 0.0
    %439 = vmatpush1.msra.mxu0 0.0
    %440 = vmatprep.subr.mxu0 0.0
    %441 = vmatpush1.msra.mxu0 0.0
    %442 = vmatprep.subr.mxu0 0.0
    %443 = vmatpush1.msra.mxu0 0.0
    %444 = vmatprep.subr.mxu0 0.0
    %445 = vmatpush1.msra.mxu0 0.0
    %446 = vmatprep.subr.mxu0 0.0
    %447 = vmatpush1.msra.mxu0 0.0
    %448 = vmatprep.subr.mxu0 0.0
    %449 = vmatpush1.msra.mxu0 0.0
    %450 = vmatprep.subr.mxu0 0.0
    %451 = vmatpush1.msra.mxu0 0.0
    %452 = vmatprep.subr.mxu0 0.0
    %453 = vmatpush1.msra.mxu0 0.0
    %454 = vmatprep.subr.mxu0 0.0
    %455 = vmatpush1.msra.mxu0 0.0
    %456 = vmatprep.subr.mxu0 0.0
    %457 = vmatpush1.msra.mxu0 0.0
    %458 = vmatprep.subr.mxu0 0.0
    %459 = vmatpush1.msra.mxu0 0.0
    %460 = vmatprep.subr.mxu0 0.0
    %461 = vmatpush1.msra.mxu0 0.0
    %462 = vmatprep.subr.mxu0 0.0
    %463 = vmatpush1.msra.mxu0 0.0
    %464 = vmatprep.subr.mxu0 0.0
    %465 = vmatpush1.msra.mxu0 0.0
    %466 = vmatprep.subr.mxu0 0.0
    %467 = vmatpush1.msra.mxu0 0.0
    %468 = vmatprep.subr.mxu0 0.0
    %469 = vmatpush1.msra.mxu0 0.0
    %470 = vmatprep.subr.mxu0 0.0
    %471 = vmatpush1.msra.mxu0 0.0
    %472 = vmatprep.subr.mxu0 0.0
    %473 = vmatpush1.msra.mxu0 0.0
    %474 = vmatprep.subr.mxu0 0.0
    %475 = vmatpush1.msra.mxu0 0.0
    %476 = vmatprep.subr.mxu0 0.0
    %477 = vmatpush1.msra.mxu0 0.0
    %478 = vmatprep.subr.mxu0 0.0
    %479 = vmatpush1.msra.mxu0 0.0
    %480 = vmatprep.subr.mxu0 0.0
    %481 = vmatpush1.msra.mxu0 0.0
    %482 = vmatprep.subr.mxu0 0.0
    %483 = vmatpush1.msra.mxu0 0.0
    %484 = vmatprep.subr.mxu0 0.0
    %485 = vmatpush1.msra.mxu0 0.0
    %486 = vmatprep.mubr.f32.mxu0 0.0
    %487 = vmatmul.mubr.f32.gmra.mrb[0].mxu0 %v420
    %v488 = vpop.f32.mrb[0].mxu0
    %v489 = vadd.f32 0.0, %v488
    %v490 = vpop.f32.mrb[0].mxu0
    %491 = vdwg.mxu0
    %v492 = vadd.f32 %v180, %v489
    %v493 = vxor.u32 %v492, 2147483648
    %v494 = vmul.f32 %v493, 1.442695
    %v495 = vpow.pop %v494
    %v496 = vadd.f32 %v495, 1.0
    %v497 = vrcp.pop %v496
    %v498 = vmul.f32 1.0, %v497
    %500 = vrot.lane.b32.xlu0 %v489, 64
    %v501 = vpop.permute.xlu0 %500
    %v503 = vmul.f32 %v498, %v501
    %505 = vrot.lane.b32.xlu0 %v503, 64
    %v506 = vpop.permute.xlu0 %505
    %v508 = vadd.f32 %v180, %v506
    %v509 = vtanh.pop %v508
    %v510 = vsub.f32 1.0, %v498
    %512 = vrot.lane.b32.xlu0 %v509, 96
    %v513 = vpop.permute.xlu0 %512
    %v515 = vmul.f32 %v510, %v513
    %v516 = vmul.f32 %v498, %v416
    %v517 = vadd.f32 %v515, %v516
    %519 = vrot.lane.b32.xlu0 %v517, 96
    %v520 = vpop.permute.xlu0 %519
    %v521 = vsel %vm213, %v520, 0
    %523 = vmatprep.subr.mxu0 0.0
    %524 = vmatpush1.msra.mxu0 %v208
    %525 = vmatprep.subr.mxu0 0.0
    %526 = vmatpush1.msra.mxu0 %v209
    %527 = vmatprep.subr.mxu0 0.0
    %528 = vmatpush1.msra.mxu0 %v210
    %529 = vmatprep.subr.mxu0 0.0
    %530 = vmatpush1.msra.mxu0 %v211
    %531 = vmatprep.subr.mxu0 0.0
    %532 = vmatpush1.msra.mxu0 0.0
    %533 = vmatprep.subr.mxu0 0.0
    %534 = vmatpush1.msra.mxu0 0.0
    %535 = vmatprep.subr.mxu0 0.0
    %536 = vmatpush1.msra.mxu0 0.0
    %537 = vmatprep.subr.mxu0 0.0
    %538 = vmatpush1.msra.mxu0 0.0
    %539 = vmatprep.subr.mxu0 0.0
    %540 = vmatpush1.msra.mxu0 0.0
    %541 = vmatprep.subr.mxu0 0.0
    %542 = vmatpush1.msra.mxu0 0.0
    %543 = vmatprep.subr.mxu0 0.0
    %544 = vmatpush1.msra.mxu0 0.0
    %545 = vmatprep.subr.mxu0 0.0
    %546 = vmatpush1.msra.mxu0 0.0
    %547 = vmatprep.subr.mxu0 0.0
    %548 = vmatpush1.msra.mxu0 0.0
    %549 = vmatprep.subr.mxu0 0.0
    %550 = vmatpush1.msra.mxu0 0.0
    %551 = vmatprep.subr.mxu0 0.0
    %552 = vmatpush1.msra.mxu0 0.0
    %553 = vmatprep.subr.mxu0 0.0
    %554 = vmatpush1.msra.mxu0 0.0
    %555 = vmatprep.subr.mxu0 0.0
    %556 = vmatpush1.msra.mxu0 0.0
    %557 = vmatprep.subr.mxu0 0.0
    %558 = vmatpush1.msra.mxu0 0.0
    %559 = vmatprep.subr.mxu0 0.0
    %560 = vmatpush1.msra.mxu0 0.0
    %561 = vmatprep.subr.mxu0 0.0
    %562 = vmatpush1.msra.mxu0 0.0
    %563 = vmatprep.subr.mxu0 0.0
    %564 = vmatpush1.msra.mxu0 0.0
    %565 = vmatprep.subr.mxu0 0.0
    %566 = vmatpush1.msra.mxu0 0.0
    %567 = vmatprep.subr.mxu0 0.0
    %568 = vmatpush1.msra.mxu0 0.0
    %569 = vmatprep.subr.mxu0 0.0
    %570 = vmatpush1.msra.mxu0 0.0
    %571 = vmatprep.subr.mxu0 0.0
    %572 = vmatpush1.msra.mxu0 0.0
    %573 = vmatprep.subr.mxu0 0.0
    %574 = vmatpush1.msra.mxu0 0.0
    %575 = vmatprep.subr.mxu0 0.0
    %576 = vmatpush1.msra.mxu0 0.0
    %577 = vmatprep.subr.mxu0 0.0
    %578 = vmatpush1.msra.mxu0 0.0
    %579 = vmatprep.subr.mxu0 0.0
    %580 = vmatpush1.msra.mxu0 0.0
    %581 = vmatprep.subr.mxu0 0.0
    %582 = vmatpush1.msra.mxu0 0.0
    %583 = vmatprep.subr.mxu0 0.0
    %584 = vmatpush1.msra.mxu0 0.0
    %585 = vmatprep.subr.mxu0 0.0
    %586 = vmatpush1.msra.mxu0 0.0
    %587 = vmatprep.mubr.f32.mxu0 0.0
    %588 = vmatmul.mubr.f32.gmra.mrb[0].mxu0 %v521
    %v589 = vpop.f32.mrb[0].mxu0
    %v590 = vadd.f32 0.0, %v589
    %v591 = vpop.f32.mrb[0].mxu0
    %592 = vdwg.mxu0
    %v593 = vadd.f32 %v185, %v590
    %v594 = vxor.u32 %v593, 2147483648
    %v595 = vmul.f32 %v594, 1.442695
    %v596 = vpow.pop %v595
    %v597 = vadd.f32 %v596, 1.0
    %v598 = vrcp.pop %v597
    %v599 = vmul.f32 1.0, %v598
    %601 = vrot.lane.b32.xlu0 %v590, 64
    %v602 = vpop.permute.xlu0 %601
    %v604 = vmul.f32 %v599, %v602
    %606 = vrot.lane.b32.xlu0 %v604, 64
    %v607 = vpop.permute.xlu0 %606
    %v609 = vadd.f32 %v185, %v607
    %v610 = vtanh.pop %v609
    %v611 = vsub.f32 1.0, %v599
    %613 = vrot.lane.b32.xlu0 %v610, 96
    %v614 = vpop.permute.xlu0 %613
    %v616 = vmul.f32 %v611, %v614
    %v617 = vmul.f32 %v599, %v517
    %v618 = vadd.f32 %v616, %v617
    %620 = vrot.lane.b32.xlu0 %v618, 96
    %v621 = vpop.permute.xlu0 %620
    %v622 = vsel %vm213, %v621, 0
    %624 = vmatprep.subr.mxu0 0.0
    %625 = vmatpush1.msra.mxu0 %v208
    %626 = vmatprep.subr.mxu0 0.0
    %627 = vmatpush1.msra.mxu0 %v209
    %628 = vmatprep.subr.mxu0 0.0
    %629 = vmatpush1.msra.mxu0 %v210
    %630 = vmatprep.subr.mxu0 0.0
    %631 = vmatpush1.msra.mxu0 %v211
    %632 = vmatprep.subr.mxu0 0.0
    %633 = vmatpush1.msra.mxu0 0.0
    %634 = vmatprep.subr.mxu0 0.0
    %635 = vmatpush1.msra.mxu0 0.0
    %636 = vmatprep.subr.mxu0 0.0
    %637 = vmatpush1.msra.mxu0 0.0
    %638 = vmatprep.subr.mxu0 0.0
    %639 = vmatpush1.msra.mxu0 0.0
    %640 = vmatprep.subr.mxu0 0.0
    %641 = vmatpush1.msra.mxu0 0.0
    %642 = vmatprep.subr.mxu0 0.0
    %643 = vmatpush1.msra.mxu0 0.0
    %644 = vmatprep.subr.mxu0 0.0
    %645 = vmatpush1.msra.mxu0 0.0
    %646 = vmatprep.subr.mxu0 0.0
    %647 = vmatpush1.msra.mxu0 0.0
    %648 = vmatprep.subr.mxu0 0.0
    %649 = vmatpush1.msra.mxu0 0.0
    %650 = vmatprep.subr.mxu0 0.0
    %651 = vmatpush1.msra.mxu0 0.0
    %652 = vmatprep.subr.mxu0 0.0
    %653 = vmatpush1.msra.mxu0 0.0
    %654 = vmatprep.subr.mxu0 0.0
    %655 = vmatpush1.msra.mxu0 0.0
    %656 = vmatprep.subr.mxu0 0.0
    %657 = vmatpush1.msra.mxu0 0.0
    %658 = vmatprep.subr.mxu0 0.0
    %659 = vmatpush1.msra.mxu0 0.0
    %660 = vmatprep.subr.mxu0 0.0
    %661 = vmatpush1.msra.mxu0 0.0
    %662 = vmatprep.subr.mxu0 0.0
    %663 = vmatpush1.msra.mxu0 0.0
    %664 = vmatprep.subr.mxu0 0.0
    %665 = vmatpush1.msra.mxu0 0.0
    %666 = vmatprep.subr.mxu0 0.0
    %667 = vmatpush1.msra.mxu0 0.0
    %668 = vmatprep.subr.mxu0 0.0
    %669 = vmatpush1.msra.mxu0 0.0
    %670 = vmatprep.subr.mxu0 0.0
    %671 = vmatpush1.msra.mxu0 0.0
    %672 = vmatprep.subr.mxu0 0.0
    %673 = vmatpush1.msra.mxu0 0.0
    %674 = vmatprep.subr.mxu0 0.0
    %675 = vmatpush1.msra.mxu0 0.0
    %676 = vmatprep.subr.mxu0 0.0
    %677 = vmatpush1.msra.mxu0 0.0
    %678 = vmatprep.subr.mxu0 0.0
    %679 = vmatpush1.msra.mxu0 0.0
    %680 = vmatprep.subr.mxu0 0.0
    %681 = vmatpush1.msra.mxu0 0.0
    %682 = vmatprep.subr.mxu0 0.0
    %683 = vmatpush1.msra.mxu0 0.0
    %684 = vmatprep.subr.mxu0 0.0
    %685 = vmatpush1.msra.mxu0 0.0
    %686 = vmatprep.subr.mxu0 0.0
    %687 = vmatpush1.msra.mxu0 0.0
    %688 = vmatprep.mubr.f32.mxu0 0.0
    %689 = vmatmul.mubr.f32.gmra.mrb[0].mxu0 %v622
    %v690 = vpop.f32.mrb[0].mxu0
    %v691 = vadd.f32 0.0, %v690
    %v692 = vpop.f32.mrb[0].mxu0
    %693 = vdwg.mxu0
    %v694 = vadd.f32 %v190, %v691
    %v695 = vxor.u32 %v694, 2147483648
    %v696 = vmul.f32 %v695, 1.442695
    %v697 = vpow.pop %v696
    %v698 = vadd.f32 %v697, 1.0
    %v699 = vrcp.pop %v698
    %v700 = vmul.f32 1.0, %v699
    %702 = vrot.lane.b32.xlu0 %v691, 64
    %v703 = vpop.permute.xlu0 %702
    %v705 = vmul.f32 %v700, %v703
    %707 = vrot.lane.b32.xlu0 %v705, 64
    %v708 = vpop.permute.xlu0 %707
    %v710 = vadd.f32 %v190, %v708
    %v711 = vtanh.pop %v710
    %v712 = vsub.f32 1.0, %v700
    %714 = vrot.lane.b32.xlu0 %v711, 96
    %v715 = vpop.permute.xlu0 %714
    %v717 = vmul.f32 %v712, %v715
    %v718 = vmul.f32 %v700, %v618
    %v719 = vadd.f32 %v717, %v718
    %721 = vrot.lane.b32.xlu0 %v719, 96
    %v722 = vpop.permute.xlu0 %721
    %v723 = vsel %vm213, %v722, 0
    %725 = vmatprep.subr.mxu0 0.0
    %726 = vmatpush1.msra.mxu0 %v208
    %727 = vmatprep.subr.mxu0 0.0
    %728 = vmatpush1.msra.mxu0 %v209
    %729 = vmatprep.subr.mxu0 0.0
    %730 = vmatpush1.msra.mxu0 %v210
    %731 = vmatprep.subr.mxu0 0.0
    %732 = vmatpush1.msra.mxu0 %v211
    %733 = vmatprep.subr.mxu0 0.0
    %734 = vmatpush1.msra.mxu0 0.0
    %735 = vmatprep.subr.mxu0 0.0
    %736 = vmatpush1.msra.mxu0 0.0
    %737 = vmatprep.subr.mxu0 0.0
    %738 = vmatpush1.msra.mxu0 0.0
    %739 = vmatprep.subr.mxu0 0.0
    %740 = vmatpush1.msra.mxu0 0.0
    %741 = vmatprep.subr.mxu0 0.0
    %742 = vmatpush1.msra.mxu0 0.0
    %743 = vmatprep.subr.mxu0 0.0
    %744 = vmatpush1.msra.mxu0 0.0
    %745 = vmatprep.subr.mxu0 0.0
    %746 = vmatpush1.msra.mxu0 0.0
    %747 = vmatprep.subr.mxu0 0.0
    %748 = vmatpush1.msra.mxu0 0.0
    %749 = vmatprep.subr.mxu0 0.0
    %750 = vmatpush1.msra.mxu0 0.0
    %751 = vmatprep.subr.mxu0 0.0
    %752 = vmatpush1.msra.mxu0 0.0
    %753 = vmatprep.subr.mxu0 0.0
    %754 = vmatpush1.msra.mxu0 0.0
    %755 = vmatprep.subr.mxu0 0.0
    %756 = vmatpush1.msra.mxu0 0.0
    %757 = vmatprep.subr.mxu0 0.0
    %758 = vmatpush1.msra.mxu0 0.0
    %759 = vmatprep.subr.mxu0 0.0
    %760 = vmatpush1.msra.mxu0 0.0
    %761 = vmatprep.subr.mxu0 0.0
    %762 = vmatpush1.msra.mxu0 0.0
    %763 = vmatprep.subr.mxu0 0.0
    %764 = vmatpush1.msra.mxu0 0.0
    %765 = vmatprep.subr.mxu0 0.0
    %766 = vmatpush1.msra.mxu0 0.0
    %767 = vmatprep.subr.mxu0 0.0
    %768 = vmatpush1.msra.mxu0 0.0
    %769 = vmatprep.subr.mxu0 0.0
    %770 = vmatpush1.msra.mxu0 0.0
    %771 = vmatprep.subr.mxu0 0.0
    %772 = vmatpush1.msra.mxu0 0.0
    %773 = vmatprep.subr.mxu0 0.0
    %774 = vmatpush1.msra.mxu0 0.0
    %775 = vmatprep.subr.mxu0 0.0
    %776 = vmatpush1.msra.mxu0 0.0
    %777 = vmatprep.subr.mxu0 0.0
    %778 = vmatpush1.msra.mxu0 0.0
    %779 = vmatprep.subr.mxu0 0.0
    %780 = vmatpush1.msra.mxu0 0.0
    %781 = vmatprep.subr.mxu0 0.0
    %782 = vmatpush1.msra.mxu0 0.0
    %783 = vmatprep.subr.mxu0 0.0
    %784 = vmatpush1.msra.mxu0 0.0
    %785 = vmatprep.subr.mxu0 0.0
    %786 = vmatpush1.msra.mxu0 0.0
    %787 = vmatprep.subr.mxu0 0.0
    %788 = vmatpush1.msra.mxu0 0.0
    %789 = vmatprep.mubr.f32.mxu0 0.0
    %790 = vmatmul.mubr.f32.gmra.mrb[0].mxu0 %v723
    %v791 = vpop.f32.mrb[0].mxu0
    %v792 = vadd.f32 0.0, %v791
    %v793 = vpop.f32.mrb[0].mxu0
    %794 = vdwg.mxu0
    %v795 = vadd.f32 %v195, %v792
    %v796 = vxor.u32 %v795, 2147483648
    %v797 = vmul.f32 %v796, 1.442695
    %v798 = vpow.pop %v797
    %v799 = vadd.f32 %v798, 1.0
    %v800 = vrcp.pop %v799
    %v801 = vmul.f32 1.0, %v800
    %803 = vrot.lane.b32.xlu0 %v792, 64
    %v804 = vpop.permute.xlu0 %803
    %v806 = vmul.f32 %v801, %v804
    %808 = vrot.lane.b32.xlu0 %v806, 64
    %v809 = vpop.permute.xlu0 %808
    %v811 = vadd.f32 %v195, %v809
    %v812 = vtanh.pop %v811
    %v813 = vsub.f32 1.0, %v801
    %815 = vrot.lane.b32.xlu0 %v812, 96
    %v816 = vpop.permute.xlu0 %815
    %v818 = vmul.f32 %v813, %v816
    %v819 = vmul.f32 %v801, %v719
    %v820 = vadd.f32 %v818, %v819
    %822 = vrot.lane.b32.xlu0 %v820, 96
    %v823 = vpop.permute.xlu0 %822
    %v824 = vsel %vm213, %v823, 0
    %826 = vmatprep.subr.mxu0 0.0
    %827 = vmatpush1.msra.mxu0 %v208
    %828 = vmatprep.subr.mxu0 0.0
    %829 = vmatpush1.msra.mxu0 %v209
    %830 = vmatprep.subr.mxu0 0.0
    %831 = vmatpush1.msra.mxu0 %v210
    %832 = vmatprep.subr.mxu0 0.0
    %833 = vmatpush1.msra.mxu0 %v211
    %834 = vmatprep.subr.mxu0 0.0
    %835 = vmatpush1.msra.mxu0 0.0
    %836 = vmatprep.subr.mxu0 0.0
    %837 = vmatpush1.msra.mxu0 0.0
    %838 = vmatprep.subr.mxu0 0.0
    %839 = vmatpush1.msra.mxu0 0.0
    %840 = vmatprep.subr.mxu0 0.0
    %841 = vmatpush1.msra.mxu0 0.0
    %842 = vmatprep.subr.mxu0 0.0
    %843 = vmatpush1.msra.mxu0 0.0
    %844 = vmatprep.subr.mxu0 0.0
    %845 = vmatpush1.msra.mxu0 0.0
    %846 = vmatprep.subr.mxu0 0.0
    %847 = vmatpush1.msra.mxu0 0.0
    %848 = vmatprep.subr.mxu0 0.0
    %849 = vmatpush1.msra.mxu0 0.0
    %850 = vmatprep.subr.mxu0 0.0
    %851 = vmatpush1.msra.mxu0 0.0
    %852 = vmatprep.subr.mxu0 0.0
    %853 = vmatpush1.msra.mxu0 0.0
    %854 = vmatprep.subr.mxu0 0.0
    %855 = vmatpush1.msra.mxu0 0.0
    %856 = vmatprep.subr.mxu0 0.0
    %857 = vmatpush1.msra.mxu0 0.0
    %858 = vmatprep.subr.mxu0 0.0
    %859 = vmatpush1.msra.mxu0 0.0
    %860 = vmatprep.subr.mxu0 0.0
    %861 = vmatpush1.msra.mxu0 0.0
    %862 = vmatprep.subr.mxu0 0.0
    %863 = vmatpush1.msra.mxu0 0.0
    %864 = vmatprep.subr.mxu0 0.0
    %865 = vmatpush1.msra.mxu0 0.0
    %866 = vmatprep.subr.mxu0 0.0
    %867 = vmatpush1.msra.mxu0 0.0
    %868 = vmatprep.subr.mxu0 0.0
    %869 = vmatpush1.msra.mxu0 0.0
    %870 = vmatprep.subr.mxu0 0.0
    %871 = vmatpush1.msra.mxu0 0.0
    %872 = vmatprep.subr.mxu0 0.0
    %873 = vmatpush1.msra.mxu0 0.0
    %874 = vmatprep.subr.mxu0 0.0
    %875 = vmatpush1.msra.mxu0 0.0
    %876 = vmatprep.subr.mxu0 0.0
    %877 = vmatpush1.msra.mxu0 0.0
    %878 = vmatprep.subr.mxu0 0.0
    %879 = vmatpush1.msra.mxu0 0.0
    %880 = vmatprep.subr.mxu0 0.0
    %881 = vmatpush1.msra.mxu0 0.0
    %882 = vmatprep.subr.mxu0 0.0
    %883 = vmatpush1.msra.mxu0 0.0
    %884 = vmatprep.subr.mxu0 0.0
    %885 = vmatpush1.msra.mxu0 0.0
    %886 = vmatprep.subr.mxu0 0.0
    %887 = vmatpush1.msra.mxu0 0.0
    %888 = vmatprep.subr.mxu0 0.0
    %889 = vmatpush1.msra.mxu0 0.0
    %890 = vmatprep.mubr.f32.mxu0 0.0
    %891 = vmatmul.mubr.f32.gmra.mrb[0].mxu0 %v824
    %v892 = vpop.f32.mrb[0].mxu0
    %v893 = vadd.f32 0.0, %v892
    %v894 = vpop.f32.mrb[0].mxu0
    %895 = vdwg.mxu0
    %v896 = vadd.f32 %v200, %v893
    %v897 = vxor.u32 %v896, 2147483648
    %v898 = vmul.f32 %v897, 1.442695
    %v899 = vpow.pop %v898
    %v900 = vadd.f32 %v899, 1.0
    %v901 = vrcp.pop %v900
    %v902 = vmul.f32 1.0, %v901
    %904 = vrot.lane.b32.xlu0 %v893, 64
    %v905 = vpop.permute.xlu0 %904
    %v907 = vmul.f32 %v902, %v905
    %909 = vrot.lane.b32.xlu0 %v907, 64
    %v910 = vpop.permute.xlu0 %909
    %v912 = vadd.f32 %v200, %v910
    %v913 = vtanh.pop %v912
    %v914 = vsub.f32 1.0, %v902
    %916 = vrot.lane.b32.xlu0 %v913, 96
    %v917 = vpop.permute.xlu0 %916
    %v919 = vmul.f32 %v914, %v917
    %v920 = vmul.f32 %v902, %v820
    %v921 = vadd.f32 %v919, %v920
    %923 = vrot.lane.b32.xlu0 %v921, 96
    %v924 = vpop.permute.xlu0 %923
    %v925 = vsel %vm213, %v924, 0
    %927 = vmatprep.subr.mxu0 0.0
    %928 = vmatpush1.msra.mxu0 %v208
    %929 = vmatprep.subr.mxu0 0.0
    %930 = vmatpush1.msra.mxu0 %v209
    %931 = vmatprep.subr.mxu0 0.0
    %932 = vmatpush1.msra.mxu0 %v210
    %933 = vmatprep.subr.mxu0 0.0
    %934 = vmatpush1.msra.mxu0 %v211
    %935 = vmatprep.subr.mxu0 0.0
    %936 = vmatpush1.msra.mxu0 0.0
    %937 = vmatprep.subr.mxu0 0.0
    %938 = vmatpush1.msra.mxu0 0.0
    %939 = vmatprep.subr.mxu0 0.0
    %940 = vmatpush1.msra.mxu0 0.0
    %941 = vmatprep.subr.mxu0 0.0
    %942 = vmatpush1.msra.mxu0 0.0
    %943 = vmatprep.subr.mxu0 0.0
    %944 = vmatpush1.msra.mxu0 0.0
    %945 = vmatprep.subr.mxu0 0.0
    %946 = vmatpush1.msra.mxu0 0.0
    %947 = vmatprep.subr.mxu0 0.0
    %948 = vmatpush1.msra.mxu0 0.0
    %949 = vmatprep.subr.mxu0 0.0
    %950 = vmatpush1.msra.mxu0 0.0
    %951 = vmatprep.subr.mxu0 0.0
    %952 = vmatpush1.msra.mxu0 0.0
    %953 = vmatprep.subr.mxu0 0.0
    %954 = vmatpush1.msra.mxu0 0.0
    %955 = vmatprep.subr.mxu0 0.0
    %956 = vmatpush1.msra.mxu0 0.0
    %957 = vmatprep.subr.mxu0 0.0
    %958 = vmatpush1.msra.mxu0 0.0
    %959 = vmatprep.subr.mxu0 0.0
    %960 = vmatpush1.msra.mxu0 0.0
    %961 = vmatprep.subr.mxu0 0.0
    %962 = vmatpush1.msra.mxu0 0.0
    %963 = vmatprep.subr.mxu0 0.0
    %964 = vmatpush1.msra.mxu0 0.0
    %965 = vmatprep.subr.mxu0 0.0
    %966 = vmatpush1.msra.mxu0 0.0
    %967 = vmatprep.subr.mxu0 0.0
    %968 = vmatpush1.msra.mxu0 0.0
    %969 = vmatprep.subr.mxu0 0.0
    %970 = vmatpush1.msra.mxu0 0.0
    %971 = vmatprep.subr.mxu0 0.0
    %972 = vmatpush1.msra.mxu0 0.0
    %973 = vmatprep.subr.mxu0 0.0
    %974 = vmatpush1.msra.mxu0 0.0
    %975 = vmatprep.subr.mxu0 0.0
    %976 = vmatpush1.msra.mxu0 0.0
    %977 = vmatprep.subr.mxu0 0.0
    %978 = vmatpush1.msra.mxu0 0.0
    %979 = vmatprep.subr.mxu0 0.0
    %980 = vmatpush1.msra.mxu0 0.0
    %981 = vmatprep.subr.mxu0 0.0
    %982 = vmatpush1.msra.mxu0 0.0
    %983 = vmatprep.subr.mxu0 0.0
    %984 = vmatpush1.msra.mxu0 0.0
    %985 = vmatprep.subr.mxu0 0.0
    %986 = vmatpush1.msra.mxu0 0.0
    %987 = vmatprep.subr.mxu0 0.0
    %988 = vmatpush1.msra.mxu0 0.0
    %989 = vmatprep.subr.mxu0 0.0
    %990 = vmatpush1.msra.mxu0 0.0
    %991 = vmatprep.mubr.f32.mxu0 0.0
    %992 = vmatmul.mubr.f32.gmra.mrb[0].mxu0 %v925
    %v993 = vpop.f32.mrb[0].mxu0
    %v994 = vadd.f32 0.0, %v993
    %v995 = vpop.f32.mrb[0].mxu0
    %996 = vdwg.mxu0
    %v997 = vadd.f32 %v205, %v994
    %v998 = vxor.u32 %v997, 2147483648
    %v999 = vmul.f32 %v998, 1.442695
    %v1000 = vpow.pop %v999
    %v1001 = vadd.f32 %v1000, 1.0
    %v1002 = vrcp.pop %v1001
    %v1003 = vmul.f32 1.0, %v1002
    %1005 = vrot.lane.b32.xlu0 %v994, 64
    %v1006 = vpop.permute.xlu0 %1005
    %v1008 = vmul.f32 %v1003, %v1006
    %1010 = vrot.lane.b32.xlu0 %v1008, 64
    %v1011 = vpop.permute.xlu0 %1010
    %v1013 = vadd.f32 %v205, %v1011
    %v1014 = vtanh.pop %v1013
    %v1015 = vsub.f32 1.0, %v1003
    %1017 = vrot.lane.b32.xlu0 %v1014, 96
    %v1018 = vpop.permute.xlu0 %1017
    %v1020 = vmul.f32 %v1015, %v1018
    %v1021 = vmul.f32 %v1003, %v921
    %v1022 = vadd.f32 %v1020, %v1021
    %1024 = vrot.lane.b32.xlu0 %v1022, 96
    %v1025 = vpop.permute.xlu0 %1024
    %1027 = vst.msk [vmem:[#allocation2] sm:$0xff] %vm213, %v1025
    %1029 = vrot.lane.b32.xlu0 %v517, 32
    %v1030 = vpop.permute.xlu0 %1029
    %1032 = vrot.lane.b32.xlu0 %v618, 64
    %v1033 = vpop.permute.xlu0 %1032
    %1036 = vrot.lane.b32.xlu0 %v921, 32
    %v1037 = vpop.permute.xlu0 %1036
    %1039 = vrot.lane.b32.xlu0 %v1022, 64
    %v1040 = vpop.permute.xlu0 %1039
    %v1042 = vsel %vm213, %v318, %v416
    %vm1043 = vcmask 523264
    %v1044 = vsel %vm1043, %v1042, %v1030
    %vm1045 = vcmask 785408
    %v1046 = vsel %vm1045, %v1044, %v1033
    %v1047 = vsel %vm213, %v722, %v820
    %v1048 = vsel %vm1043, %v1047, %v1037
    %v1049 = vsel %vm1045, %v1048, %v1040
    %v1050 = vld [vmem:[%s3] sm:$0x3]
    %v1052 = vlaneseq
    %v1053 = vshrl.u32 %v1052, 7
    %v1054 = vsub.s32 0, %v1053
    %v1055 = vrot.slane %v1050, %v1054
    %v1056 = vlaneseq
    %v1057 = vshrl.u32 %v1056, 7
    %v1058 = vsub.s32 1, %v1057
    %v1059 = vrot.slane %v1050, %v1058
    %v1062 = vmul.f32 %v1046, %v1055
    %v1063 = vmul.f32 %v1049, %v1059
    %v1064 = vld [vmem:[%s4] sm:$0x3]
    %v1066 = vlaneseq
    %v1067 = vshrl.u32 %v1066, 7
    %v1068 = vsub.s32 0, %v1067
    %v1069 = vrot.slane %v1064, %v1068
    %v1070 = vlaneseq
    %v1071 = vshrl.u32 %v1070, 7
    %v1072 = vsub.s32 1, %v1071
    %v1073 = vrot.slane %v1064, %v1072
    %v1076 = vadd.f32 %v1062, %v1069
    %v1077 = vadd.f32 %v1063, %v1073
    %1078 = vst [vmem:[#allocation9] sm:$0xff] %v1076
    %1079 = vst [vmem:[#allocation9 + $0x8] sm:$0xff] %v1077
    // Predicated region
    $region38: #{tpu_custom_call.1} parent=1 // pred_check
      _
    $region39: #{tpu_custom_call.1} parent=1 // pred_check_branch
      %1081 = sbr.rel (0) target = $region41
    $region40: #{tpu_custom_call.1} parent=1 // pred_region
      %s1083 = ssub.s32 256, 256
      %1084 = vsyncadd [#allocation5], %s1083
      %s1086 = sshll.u32 [#allocation9], 4
      %s1087 = int_to_ptr.vmem [resolvable:$true] %s1086
      %1089 = dma.vmem_to_hbm [thread:$0]  %s1087, 256, %s5, [#allocation5]
    $region41: #{tpu_custom_call.1} parent=1 // pred_fallthru
      _
    // Predicated region
    $region42: #{tpu_custom_call.1} parent=1 // pred_check
      _
    $region43: #{tpu_custom_call.1} parent=1 // pred_check_branch
      %1091 = sbr.rel (0) target = $region45
    $region44: #{tpu_custom_call.1} parent=1 // pred_region
      %1092 = dma.done [#allocation5], 256
    $region45: #{tpu_custom_call.1} parent=1 // pred_fallthru
      _
    %1093 = vsyncpa [#allocation4], 1
    %1094 = vsyncpa [#allocation7], 1
    %1095 = vsyncpa [#allocation5], 1

</llo_original>
